<compile_context>
chip_gen: v5e
topology: v5e:2x2
jax: 0.10.0
libtpu: 0.0.40
codegen_flags: <defaults>
</compile_context>

<pallas_src>
import functools

import jax
import jax.numpy as jnp
from jax.scipy.linalg import block_diag
from jax.experimental import pallas as pl
from jax.experimental.pallas import tpu as pltpu


# ---------------------------------------------------------------------------
# Fused Pallas kernel: one grid step == one scene, everything in VMEM.
# ---------------------------------------------------------------------------

def _relu(v):
    return jnp.maximum(v, 0.0)


def pecnet_fused_kernel(
    # per-scene inputs (leading scene dim squeezed out by BlockSpec)
    x_ref, mask_ref, z_ref,
    # encoder_past MLP
    ew1, eb1, ew2, eb2, ew3, eb3,
    # merged theta/phi/g MLP (W1 concat on out-dim, W2/W3 block-diagonal)
    pw1, pb1, pw2, pb2, pw3, pb3,
    # decoder MLP with W1 split into ftraj part and z part
    dw1f, dw1z, db1, dw2, db2, dw3, db3,
    # output
    o_ref,
    *, nonlocal_pools, non_local_dim, fdim):
  f32 = jnp.float32
  x = x_ref[...]
  mask = mask_ref[...]

  # ---- encoder_past: 3-layer MLP, ReLU on the first two layers -------------
  h = _relu(jnp.dot(x, ew1[...], preferred_element_type=f32) + eb1[...])
  h = _relu(jnp.dot(h, ew2[...], preferred_element_type=f32) + eb2[...])
  ftraj = jnp.dot(h, ew3[...], preferred_element_type=f32) + eb3[...]

  # ---- non-local social pooling, unrolled (nonlocal_pools is static) -------
  nd = non_local_dim
  for _ in range(nonlocal_pools):
    # Merged theta/phi/g MLPs: one matmul chain, then slice the output lanes.
    t = _relu(jnp.dot(ftraj, pw1[...], preferred_element_type=f32) + pb1[...])
    t = _relu(jnp.dot(t, pw2[...], preferred_element_type=f32) + pb2[...])
    tpg = jnp.dot(t, pw3[...], preferred_element_type=f32) + pb3[...]
    theta = tpg[:, :nd]
    phi = tpg[:, nd:2 * nd]
    g = tpg[:, 2 * nd:2 * nd + fdim]

    # f = theta @ phi^T   (contract feature dims of both operands)
    f = jax.lax.dot_general(theta, phi, (((1,), (1,)), ((), ())),
                            preferred_element_type=f32)
    # softmax(dim=-1) -> *mask -> F.normalize(p=1, dim=1) collapses to
    #   e*mask / max(sum(e*mask), 1e-12)
    # (exact unless a mask row is all-zero, where only the eps clamp differs).
    f = f - jnp.max(f, axis=-1, keepdims=True)
    e = jnp.exp(f) * mask
    denom = jnp.maximum(jnp.sum(e, axis=-1, keepdims=True), 1e-12)
    w = e * pl.reciprocal(denom, approx=True)      # divide on the EUP slot
    pooled = jnp.dot(w, g, preferred_element_type=f32)
    ftraj = pooled + ftraj

  # ---- decoder on concat(ftraj, z): split-W1 avoids any concatenate --------
  h = _relu(jnp.dot(ftraj, dw1f[...], preferred_element_type=f32)
            + jnp.dot(z_ref[...], dw1z[...], preferred_element_type=f32)
            + db1[...])
  h = _relu(jnp.dot(h, dw2[...], preferred_element_type=f32) + db2[...])
  o_ref[...] = jnp.dot(h, dw3[...], preferred_element_type=f32) + db3[...]


# ---------------------------------------------------------------------------
# Parameter construction & packing
# ---------------------------------------------------------------------------

def init_mlp(key, dims, scale=0.08):
  """dims = [d0, d1, d2, d3] -> 3 (W, b) pairs, W stored (in, out)."""
  params = []
  for i in range(len(dims) - 1):
    key, kw, kb = jax.random.split(key, 3)
    w = scale * jax.random.normal(kw, (dims[i], dims[i + 1]), dtype=jnp.float32)
    b = scale * jax.random.normal(kb, (1, dims[i + 1]), dtype=jnp.float32)
    params.append((w, b))
  return params, key


def pack_params(params, fdim, zdim):
  """Pack per-MLP params into the fused-kernel layout (flat tuple, kernel order)."""
  (ew1, eb1), (ew2, eb2), (ew3, eb3) = params["encoder_past"]

  th = params["non_local_theta_past"]
  ph = params["non_local_phi_past"]
  gg = params["non_local_g_past"]
  # Layer 1: concatenate output columns.  Layers 2/3: block-diagonal — the
  # elementwise ReLU between layers preserves the per-branch independence, so
  # this is numerically identical to running the three MLPs separately.
  pw1 = jnp.concatenate([th[0][0], ph[0][0], gg[0][0]], axis=1)
  pb1 = jnp.concatenate([th[0][1], ph[0][1], gg[0][1]], axis=1)
  pw2 = block_diag(th[1][0], ph[1][0], gg[1][0])
  pb2 = jnp.concatenate([th[1][1], ph[1][1], gg[1][1]], axis=1)
  pw3 = block_diag(th[2][0], ph[2][0], gg[2][0])
  pb3 = jnp.concatenate([th[2][1], ph[2][1], gg[2][1]], axis=1)

  (dw1, db1), (dw2, db2), (dw3, db3) = params["decoder"]
  dw1f = dw1[:fdim, :]
  dw1z = dw1[fdim:fdim + zdim, :]

  return (ew1, eb1, ew2, eb2, ew3, eb3,
          pw1, pb1, pw2, pb2, pw3, pb3,
          dw1f, dw1z, db1, dw2, db2, dw3, db3)


# ---------------------------------------------------------------------------
# PECNet_new eval forward (batched over scenes; grid axis == scene)
# ---------------------------------------------------------------------------

def pecnet_forward(x, initial_pos, mask, z, packed, *, nonlocal_pools,
                   non_local_dim, fdim):
  """x: (S, N, 2*past_length), mask: (S, N, N), z: (S, N, zdim) -> (S, N, 2)."""
  del initial_pos  # part of the torch signature, unused on the eval path
  S, N, d_in = x.shape
  zdim = z.shape[-1]

  kernel = functools.partial(
      pecnet_fused_kernel,
      nonlocal_pools=nonlocal_pools,
      non_local_dim=non_local_dim,
      fdim=fdim)

  def scene_spec(d):
    return pl.BlockSpec((None, N, d), lambda s: (s, 0, 0))

  in_specs = [scene_spec(d_in),                                   # x
              pl.BlockSpec((None, N, N), lambda s: (s, 0, 0)),    # mask
              scene_spec(zdim)]                                   # z
  # Weights / biases: full array resident in VMEM, same block every grid step.
  in_specs += [pl.BlockSpec(p.shape, lambda s: (0, 0)) for p in packed]

  return pl.pallas_call(
      kernel,
      out_shape=jax.ShapeDtypeStruct((S, N, 2), jnp.float32),
      grid=(S,),
      in_specs=in_specs,
      out_specs=pl.BlockSpec((None, N, 2), lambda s: (s, 0, 0)),
      compiler_params=pltpu.CompilerParams(
          dimension_semantics=("parallel",)),   # shards scenes across TCs on v7x
  )(x, mask, z, *packed)


# ---------------------------------------------------------------------------
# Pure-JAX reference (mirrors the torch eval path) for a correctness check
# ---------------------------------------------------------------------------

def _ref_mlp3(x, p):
  (w1, b1), (w2, b2), (w3, b3) = p
  h = jax.nn.relu(x @ w1 + b1)
  h = jax.nn.relu(h @ w2 + b2)
  return h @ w3 + b3


def _ref_forward_single(x, mask, z, params, nonlocal_pools):
  ftraj = _ref_mlp3(x, params["encoder_past"])
  for _ in range(nonlocal_pools):
    theta = _ref_mlp3(ftraj, params["non_local_theta_past"])
    phi = _ref_mlp3(ftraj, params["non_local_phi_past"])
    g = _ref_mlp3(ftraj, params["non_local_g_past"])
    f = theta @ phi.T
    w = jax.nn.softmax(f, axis=-1) * mask
    w = w / jnp.maximum(jnp.sum(jnp.abs(w), axis=1, keepdims=True), 1e-12)
    ftraj = w @ g + ftraj
  dec_in = jnp.concatenate([ftraj, z], axis=1)
  return _ref_mlp3(dec_in, params["decoder"])


if __name__ == "__main__":
  # Small configuration consistent with the module's constructor:
  #   past_length=8 -> encoder_past input dim = 16
  #   fdim=16, zdim=16, non_local_dim=16, sigma=1.3, nonlocal_pools=2
  #   hidden sizes all (32, 32) -> every MLP is 3 linear layers
  S = 4                 # scenes (batched on the parallel grid axis)
  N = 8                 # agents per scene
  PAST_LENGTH = 8
  FDIM = 16
  ZDIM = 16
  NON_LOCAL_DIM = 16
  HIDDEN = 32
  SIGMA = 1.3
  NONLOCAL_POOLS = 2

  key = jax.random.PRNGKey(0)

  params = {}
  params["encoder_past"], key = init_mlp(
      key, [PAST_LENGTH * 2, HIDDEN, HIDDEN, FDIM])
  params["non_local_theta_past"], key = init_mlp(
      key, [FDIM, HIDDEN, HIDDEN, NON_LOCAL_DIM])
  params["non_local_phi_past"], key = init_mlp(
      key, [FDIM, HIDDEN, HIDDEN, NON_LOCAL_DIM])
  params["non_local_g_past"], key = init_mlp(
      key, [FDIM, HIDDEN, HIDDEN, FDIM])
  params["decoder"], key = init_mlp(
      key, [FDIM + ZDIM, HIDDEN, HIDDEN, 2])

  packed = pack_params(params, FDIM, ZDIM)

  key, kx, kp, kz = jax.random.split(key, 4)
  x = jax.random.normal(kx, (S, N, PAST_LENGTH * 2), dtype=jnp.float32)
  initial_pos = jax.random.normal(kp, (S, N, 2), dtype=jnp.float32)
  mask = jnp.ones((S, N, N), dtype=jnp.float32)          # all agents interact
  z = SIGMA * jax.random.normal(kz, (S, N, ZDIM), dtype=jnp.float32)

  generated_dest = pecnet_forward(
      x, initial_pos, mask, z, packed,
      nonlocal_pools=NONLOCAL_POOLS, non_local_dim=NON_LOCAL_DIM, fdim=FDIM)
  generated_dest = jax.block_until_ready(generated_dest)

  assert generated_dest.shape == (S, N, 2)
  assert bool(jnp.all(jnp.isfinite(generated_dest)))

  # Check against the pure-JAX reference of the torch eval path.
  ref = jax.vmap(
      lambda xs, ms, zs: _ref_forward_single(xs, ms, zs, params, NONLOCAL_POOLS)
  )(x, mask, z)
  max_err = float(jnp.max(jnp.abs(generated_dest - ref)))
  assert max_err < 1e-2, f"max abs diff vs reference too large: {max_err}"

  print("KERNEL_OK")
</pallas_src>

<mosaic_0001>
module attributes {stable_mosaic.version = 11 : i64} {
  func.func @pecnet_fused_kernel(%arg0: i32, %arg1: memref<1x8x16xf32, #tpu.memory_space<vmem>>, %arg2: memref<1x8x8xf32, #tpu.memory_space<vmem>>, %arg3: memref<1x8x16xf32, #tpu.memory_space<vmem>>, %arg4: memref<16x32xf32, #tpu.memory_space<vmem>>, %arg5: memref<1x32xf32, #tpu.memory_space<vmem>>, %arg6: memref<32x32xf32, #tpu.memory_space<vmem>>, %arg7: memref<1x32xf32, #tpu.memory_space<vmem>>, %arg8: memref<32x16xf32, #tpu.memory_space<vmem>>, %arg9: memref<1x16xf32, #tpu.memory_space<vmem>>, %arg10: memref<16x96xf32, #tpu.memory_space<vmem>>, %arg11: memref<1x96xf32, #tpu.memory_space<vmem>>, %arg12: memref<96x96xf32, #tpu.memory_space<vmem>>, %arg13: memref<1x96xf32, #tpu.memory_space<vmem>>, %arg14: memref<96x48xf32, #tpu.memory_space<vmem>>, %arg15: memref<1x48xf32, #tpu.memory_space<vmem>>, %arg16: memref<16x32xf32, #tpu.memory_space<vmem>>, %arg17: memref<16x32xf32, #tpu.memory_space<vmem>>, %arg18: memref<1x32xf32, #tpu.memory_space<vmem>>, %arg19: memref<32x32xf32, #tpu.memory_space<vmem>>, %arg20: memref<1x32xf32, #tpu.memory_space<vmem>>, %arg21: memref<32x2xf32, #tpu.memory_space<vmem>>, %arg22: memref<1x2xf32, #tpu.memory_space<vmem>>, %arg23: memref<1x8x2xf32, #tpu.memory_space<vmem>>) attributes {dimension_semantics = [#tpu.dimension_semantics<parallel>], iteration_bounds = array<i64: 4>, scalar_prefetch = 0 : i64, scratch_operands = 0 : i64, tpu.core_type = #tpu.core_type<tc>, window_params = [{transform_indices = @transform_0, window_bounds = array<i64: 1, 8, 16>}, {transform_indices = @transform_1, window_bounds = array<i64: 1, 8, 8>}, {transform_indices = @transform_2, window_bounds = array<i64: 1, 8, 16>}, {pipeline_mode = #tpu.pipeline_mode<synchronous>, transform_indices = @transform_3, window_bounds = array<i64: 16, 32>}, {pipeline_mode = #tpu.pipeline_mode<synchronous>, transform_indices = @transform_4, window_bounds = array<i64: 1, 32>}, {pipeline_mode = #tpu.pipeline_mode<synchronous>, transform_indices = @transform_5, window_bounds = array<i64: 32, 32>}, {pipeline_mode = #tpu.pipeline_mode<synchronous>, transform_indices = @transform_6, window_bounds = array<i64: 1, 32>}, {pipeline_mode = #tpu.pipeline_mode<synchronous>, transform_indices = @transform_7, window_bounds = array<i64: 32, 16>}, {pipeline_mode = #tpu.pipeline_mode<synchronous>, transform_indices = @transform_8, window_bounds = array<i64: 1, 16>}, {pipeline_mode = #tpu.pipeline_mode<synchronous>, transform_indices = @transform_9, window_bounds = array<i64: 16, 96>}, {pipeline_mode = #tpu.pipeline_mode<synchronous>, transform_indices = @transform_10, window_bounds = array<i64: 1, 96>}, {pipeline_mode = #tpu.pipeline_mode<synchronous>, transform_indices = @transform_11, window_bounds = array<i64: 96, 96>}, {pipeline_mode = #tpu.pipeline_mode<synchronous>, transform_indices = @transform_12, window_bounds = array<i64: 1, 96>}, {pipeline_mode = #tpu.pipeline_mode<synchronous>, transform_indices = @transform_13, window_bounds = array<i64: 96, 48>}, {pipeline_mode = #tpu.pipeline_mode<synchronous>, transform_indices = @transform_14, window_bounds = array<i64: 1, 48>}, {pipeline_mode = #tpu.pipeline_mode<synchronous>, transform_indices = @transform_15, window_bounds = array<i64: 16, 32>}, {pipeline_mode = #tpu.pipeline_mode<synchronous>, transform_indices = @transform_16, window_bounds = array<i64: 16, 32>}, {pipeline_mode = #tpu.pipeline_mode<synchronous>, transform_indices = @transform_17, window_bounds = array<i64: 1, 32>}, {pipeline_mode = #tpu.pipeline_mode<synchronous>, transform_indices = @transform_18, window_bounds = array<i64: 32, 32>}, {pipeline_mode = #tpu.pipeline_mode<synchronous>, transform_indices = @transform_19, window_bounds = array<i64: 1, 32>}, {pipeline_mode = #tpu.pipeline_mode<synchronous>, transform_indices = @transform_20, window_bounds = array<i64: 32, 2>}, {pipeline_mode = #tpu.pipeline_mode<synchronous>, transform_indices = @transform_21, window_bounds = array<i64: 1, 2>}, {transform_indices = @transform_22, window_bounds = array<i64: 1, 8, 2>}]} {
    %c0 = arith.constant 0 : index
    %c0_0 = arith.constant 0 : index
    %c0_1 = arith.constant 0 : index
    %0 = vector.load %arg1[%c0, %c0_0, %c0_1] : memref<1x8x16xf32, #tpu.memory_space<vmem>>, vector<1x8x16xf32>
    %1 = vector.shape_cast %0 : vector<1x8x16xf32> to vector<8x16xf32>
    %c0_2 = arith.constant 0 : index
    %c0_3 = arith.constant 0 : index
    %c0_4 = arith.constant 0 : index
    %2 = vector.load %arg2[%c0_2, %c0_3, %c0_4] : memref<1x8x8xf32, #tpu.memory_space<vmem>>, vector<1x8x8xf32>
    %3 = vector.shape_cast %2 : vector<1x8x8xf32> to vector<8x8xf32>
    %c0_5 = arith.constant 0 : index
    %c0_6 = arith.constant 0 : index
    %4 = vector.load %arg4[%c0_5, %c0_6] : memref<16x32xf32, #tpu.memory_space<vmem>>, vector<16x32xf32>
    %cst = arith.constant dense<0.000000e+00> : vector<8x32xf32>
    %5 = tpu.matmul %1, %4, %cst {dimension_numbers = #tpu.dot_dimension_numbers<[1], [0], [0], [1], [0, 0, 1, 1], [], []>} : vector<8x16xf32>, vector<16x32xf32>, vector<8x32xf32> -> vector<8x32xf32>
    %c0_7 = arith.constant 0 : index
    %c0_8 = arith.constant 0 : index
    %6 = vector.load %arg5[%c0_7, %c0_8] : memref<1x32xf32, #tpu.memory_space<vmem>>, vector<1x32xf32>
    %7 = vector.broadcast %6 : vector<1x32xf32> to vector<8x32xf32>
    %8 = arith.addf %5, %7 : vector<8x32xf32>
    %cst_9 = arith.constant 0.000000e+00 : f32
    %9 = vector.broadcast %cst_9 : f32 to vector<8x32xf32>
    %10 = arith.maximumf %8, %9 : vector<8x32xf32>
    %c0_10 = arith.constant 0 : index
    %c0_11 = arith.constant 0 : index
    %11 = vector.load %arg6[%c0_10, %c0_11] : memref<32x32xf32, #tpu.memory_space<vmem>>, vector<32x32xf32>
    %cst_12 = arith.constant dense<0.000000e+00> : vector<8x32xf32>
    %12 = tpu.matmul %10, %11, %cst_12 {dimension_numbers = #tpu.dot_dimension_numbers<[1], [0], [0], [1], [0, 0, 1, 1], [], []>} : vector<8x32xf32>, vector<32x32xf32>, vector<8x32xf32> -> vector<8x32xf32>
    %c0_13 = arith.constant 0 : index
    %c0_14 = arith.constant 0 : index
    %13 = vector.load %arg7[%c0_13, %c0_14] : memref<1x32xf32, #tpu.memory_space<vmem>>, vector<1x32xf32>
    %14 = vector.broadcast %13 : vector<1x32xf32> to vector<8x32xf32>
    %15 = arith.addf %12, %14 : vector<8x32xf32>
    %cst_15 = arith.constant 0.000000e+00 : f32
    %16 = vector.broadcast %cst_15 : f32 to vector<8x32xf32>
    %17 = arith.maximumf %15, %16 : vector<8x32xf32>
    %c0_16 = arith.constant 0 : index
    %c0_17 = arith.constant 0 : index
    %18 = vector.load %arg8[%c0_16, %c0_17] : memref<32x16xf32, #tpu.memory_space<vmem>>, vector<32x16xf32>
    %cst_18 = arith.constant dense<0.000000e+00> : vector<8x16xf32>
    %19 = tpu.matmul %17, %18, %cst_18 {dimension_numbers = #tpu.dot_dimension_numbers<[1], [0], [0], [1], [0, 0, 1, 1], [], []>} : vector<8x32xf32>, vector<32x16xf32>, vector<8x16xf32> -> vector<8x16xf32>
    %c0_19 = arith.constant 0 : index
    %c0_20 = arith.constant 0 : index
    %20 = vector.load %arg9[%c0_19, %c0_20] : memref<1x16xf32, #tpu.memory_space<vmem>>, vector<1x16xf32>
    %21 = vector.broadcast %20 : vector<1x16xf32> to vector<8x16xf32>
    %22 = arith.addf %19, %21 : vector<8x16xf32>
    %c0_21 = arith.constant 0 : index
    %c0_22 = arith.constant 0 : index
    %23 = vector.load %arg10[%c0_21, %c0_22] : memref<16x96xf32, #tpu.memory_space<vmem>>, vector<16x96xf32>
    %cst_23 = arith.constant dense<0.000000e+00> : vector<8x96xf32>
    %24 = tpu.matmul %22, %23, %cst_23 {dimension_numbers = #tpu.dot_dimension_numbers<[1], [0], [0], [1], [0, 0, 1, 1], [], []>} : vector<8x16xf32>, vector<16x96xf32>, vector<8x96xf32> -> vector<8x96xf32>
    %c0_24 = arith.constant 0 : index
    %c0_25 = arith.constant 0 : index
    %25 = vector.load %arg11[%c0_24, %c0_25] : memref<1x96xf32, #tpu.memory_space<vmem>>, vector<1x96xf32>
    %26 = vector.broadcast %25 : vector<1x96xf32> to vector<8x96xf32>
    %27 = arith.addf %24, %26 : vector<8x96xf32>
    %cst_26 = arith.constant 0.000000e+00 : f32
    %28 = vector.broadcast %cst_26 : f32 to vector<8x96xf32>
    %29 = arith.maximumf %27, %28 : vector<8x96xf32>
    %c0_27 = arith.constant 0 : index
    %c0_28 = arith.constant 0 : index
    %30 = vector.load %arg12[%c0_27, %c0_28] : memref<96x96xf32, #tpu.memory_space<vmem>>, vector<96x96xf32>
    %cst_29 = arith.constant dense<0.000000e+00> : vector<8x96xf32>
    %31 = tpu.matmul %29, %30, %cst_29 {dimension_numbers = #tpu.dot_dimension_numbers<[1], [0], [0], [1], [0, 0, 1, 1], [], []>} : vector<8x96xf32>, vector<96x96xf32>, vector<8x96xf32> -> vector<8x96xf32>
    %c0_30 = arith.constant 0 : index
    %c0_31 = arith.constant 0 : index
    %32 = vector.load %arg13[%c0_30, %c0_31] : memref<1x96xf32, #tpu.memory_space<vmem>>, vector<1x96xf32>
    %33 = vector.broadcast %32 : vector<1x96xf32> to vector<8x96xf32>
    %34 = arith.addf %31, %33 : vector<8x96xf32>
    %cst_32 = arith.constant 0.000000e+00 : f32
    %35 = vector.broadcast %cst_32 : f32 to vector<8x96xf32>
    %36 = arith.maximumf %34, %35 : vector<8x96xf32>
    %c0_33 = arith.constant 0 : index
    %c0_34 = arith.constant 0 : index
    %37 = vector.load %arg14[%c0_33, %c0_34] : memref<96x48xf32, #tpu.memory_space<vmem>>, vector<96x48xf32>
    %cst_35 = arith.constant dense<0.000000e+00> : vector<8x48xf32>
    %38 = tpu.matmul %36, %37, %cst_35 {dimension_numbers = #tpu.dot_dimension_numbers<[1], [0], [0], [1], [0, 0, 1, 1], [], []>} : vector<8x96xf32>, vector<96x48xf32>, vector<8x48xf32> -> vector<8x48xf32>
    %c0_36 = arith.constant 0 : index
    %c0_37 = arith.constant 0 : index
    %39 = vector.load %arg15[%c0_36, %c0_37] : memref<1x48xf32, #tpu.memory_space<vmem>>, vector<1x48xf32>
    %40 = vector.broadcast %39 : vector<1x48xf32> to vector<8x48xf32>
    %41 = arith.addf %38, %40 : vector<8x48xf32>
    %42 = vector.extract_strided_slice %41 {offsets = [0, 0], sizes = [8, 16], strides = [1, 1]} : vector<8x48xf32> to vector<8x16xf32>
    %43 = vector.extract_strided_slice %41 {offsets = [0, 16], sizes = [8, 16], strides = [1, 1]} : vector<8x48xf32> to vector<8x16xf32>
    %44 = vector.extract_strided_slice %41 {offsets = [0, 32], sizes = [8, 16], strides = [1, 1]} : vector<8x48xf32> to vector<8x16xf32>
    %cst_38 = arith.constant dense<0.000000e+00> : vector<8x8xf32>
    %45 = tpu.matmul %42, %43, %cst_38 {dimension_numbers = #tpu.dot_dimension_numbers<[1], [1], [0], [0], [0, 0, 1, 0], [], []>} : vector<8x16xf32>, vector<8x16xf32>, vector<8x8xf32> -> vector<8x8xf32>
    %cst_39 = arith.constant dense<0xFF800000> : vector<8xf32>
    %46 = vector.multi_reduction <maximumf>, %45, %cst_39 [1] : vector<8x8xf32> to vector<8xf32>
    %47 = vector.shape_cast %46 : vector<8xf32> to vector<8x1xf32>
    %48 = vector.broadcast %47 : vector<8x1xf32> to vector<8x8xf32>
    %49 = arith.subf %45, %48 : vector<8x8xf32>
    %50 = math.exp %49 : vector<8x8xf32>
    %51 = arith.mulf %50, %3 : vector<8x8xf32>
    %cst_40 = arith.constant dense<0.000000e+00> : vector<8xf32>
    %52 = vector.multi_reduction <add>, %51, %cst_40 [1] : vector<8x8xf32> to vector<8xf32>
    %53 = vector.shape_cast %52 : vector<8xf32> to vector<8x1xf32>
    %cst_41 = arith.constant 9.99999996E-13 : f32
    %54 = vector.broadcast %cst_41 : f32 to vector<8x1xf32>
    %55 = arith.maximumf %53, %54 : vector<8x1xf32>
    %56 = tpu.reciprocal %55 {approx = true} : vector<8x1xf32> -> vector<8x1xf32>
    %57 = vector.broadcast %56 : vector<8x1xf32> to vector<8x8xf32>
    %58 = arith.mulf %51, %57 : vector<8x8xf32>
    %cst_42 = arith.constant dense<0.000000e+00> : vector<8x16xf32>
    %59 = tpu.matmul %58, %44, %cst_42 {dimension_numbers = #tpu.dot_dimension_numbers<[1], [0], [0], [1], [0, 0, 1, 1], [], []>} : vector<8x8xf32>, vector<8x16xf32>, vector<8x16xf32> -> vector<8x16xf32>
    %60 = arith.addf %59, %22 : vector<8x16xf32>
    %c0_43 = arith.constant 0 : index
    %c0_44 = arith.constant 0 : index
    %61 = vector.load %arg10[%c0_43, %c0_44] : memref<16x96xf32, #tpu.memory_space<vmem>>, vector<16x96xf32>
    %cst_45 = arith.constant dense<0.000000e+00> : vector<8x96xf32>
    %62 = tpu.matmul %60, %61, %cst_45 {dimension_numbers = #tpu.dot_dimension_numbers<[1], [0], [0], [1], [0, 0, 1, 1], [], []>} : vector<8x16xf32>, vector<16x96xf32>, vector<8x96xf32> -> vector<8x96xf32>
    %c0_46 = arith.constant 0 : index
    %c0_47 = arith.constant 0 : index
    %63 = vector.load %arg11[%c0_46, %c0_47] : memref<1x96xf32, #tpu.memory_space<vmem>>, vector<1x96xf32>
    %64 = vector.broadcast %63 : vector<1x96xf32> to vector<8x96xf32>
    %65 = arith.addf %62, %64 : vector<8x96xf32>
    %cst_48 = arith.constant 0.000000e+00 : f32
    %66 = vector.broadcast %cst_48 : f32 to vector<8x96xf32>
    %67 = arith.maximumf %65, %66 : vector<8x96xf32>
    %c0_49 = arith.constant 0 : index
    %c0_50 = arith.constant 0 : index
    %68 = vector.load %arg12[%c0_49, %c0_50] : memref<96x96xf32, #tpu.memory_space<vmem>>, vector<96x96xf32>
    %cst_51 = arith.constant dense<0.000000e+00> : vector<8x96xf32>
    %69 = tpu.matmul %67, %68, %cst_51 {dimension_numbers = #tpu.dot_dimension_numbers<[1], [0], [0], [1], [0, 0, 1, 1], [], []>} : vector<8x96xf32>, vector<96x96xf32>, vector<8x96xf32> -> vector<8x96xf32>
    %c0_52 = arith.constant 0 : index
    %c0_53 = arith.constant 0 : index
    %70 = vector.load %arg13[%c0_52, %c0_53] : memref<1x96xf32, #tpu.memory_space<vmem>>, vector<1x96xf32>
    %71 = vector.broadcast %70 : vector<1x96xf32> to vector<8x96xf32>
    %72 = arith.addf %69, %71 : vector<8x96xf32>
    %cst_54 = arith.constant 0.000000e+00 : f32
    %73 = vector.broadcast %cst_54 : f32 to vector<8x96xf32>
    %74 = arith.maximumf %72, %73 : vector<8x96xf32>
    %c0_55 = arith.constant 0 : index
    %c0_56 = arith.constant 0 : index
    %75 = vector.load %arg14[%c0_55, %c0_56] : memref<96x48xf32, #tpu.memory_space<vmem>>, vector<96x48xf32>
    %cst_57 = arith.constant dense<0.000000e+00> : vector<8x48xf32>
    %76 = tpu.matmul %74, %75, %cst_57 {dimension_numbers = #tpu.dot_dimension_numbers<[1], [0], [0], [1], [0, 0, 1, 1], [], []>} : vector<8x96xf32>, vector<96x48xf32>, vector<8x48xf32> -> vector<8x48xf32>
    %c0_58 = arith.constant 0 : index
    %c0_59 = arith.constant 0 : index
    %77 = vector.load %arg15[%c0_58, %c0_59] : memref<1x48xf32, #tpu.memory_space<vmem>>, vector<1x48xf32>
    %78 = vector.broadcast %77 : vector<1x48xf32> to vector<8x48xf32>
    %79 = arith.addf %76, %78 : vector<8x48xf32>
    %80 = vector.extract_strided_slice %79 {offsets = [0, 0], sizes = [8, 16], strides = [1, 1]} : vector<8x48xf32> to vector<8x16xf32>
    %81 = vector.extract_strided_slice %79 {offsets = [0, 16], sizes = [8, 16], strides = [1, 1]} : vector<8x48xf32> to vector<8x16xf32>
    %82 = vector.extract_strided_slice %79 {offsets = [0, 32], sizes = [8, 16], strides = [1, 1]} : vector<8x48xf32> to vector<8x16xf32>
    %cst_60 = arith.constant dense<0.000000e+00> : vector<8x8xf32>
    %83 = tpu.matmul %80, %81, %cst_60 {dimension_numbers = #tpu.dot_dimension_numbers<[1], [1], [0], [0], [0, 0, 1, 0], [], []>} : vector<8x16xf32>, vector<8x16xf32>, vector<8x8xf32> -> vector<8x8xf32>
    %cst_61 = arith.constant dense<0xFF800000> : vector<8xf32>
    %84 = vector.multi_reduction <maximumf>, %83, %cst_61 [1] : vector<8x8xf32> to vector<8xf32>
    %85 = vector.shape_cast %84 : vector<8xf32> to vector<8x1xf32>
    %86 = vector.broadcast %85 : vector<8x1xf32> to vector<8x8xf32>
    %87 = arith.subf %83, %86 : vector<8x8xf32>
    %88 = math.exp %87 : vector<8x8xf32>
    %89 = arith.mulf %88, %3 : vector<8x8xf32>
    %cst_62 = arith.constant dense<0.000000e+00> : vector<8xf32>
    %90 = vector.multi_reduction <add>, %89, %cst_62 [1] : vector<8x8xf32> to vector<8xf32>
    %91 = vector.shape_cast %90 : vector<8xf32> to vector<8x1xf32>
    %cst_63 = arith.constant 9.99999996E-13 : f32
    %92 = vector.broadcast %cst_63 : f32 to vector<8x1xf32>
    %93 = arith.maximumf %91, %92 : vector<8x1xf32>
    %94 = tpu.reciprocal %93 {approx = true} : vector<8x1xf32> -> vector<8x1xf32>
    %95 = vector.broadcast %94 : vector<8x1xf32> to vector<8x8xf32>
    %96 = arith.mulf %89, %95 : vector<8x8xf32>
    %cst_64 = arith.constant dense<0.000000e+00> : vector<8x16xf32>
    %97 = tpu.matmul %96, %82, %cst_64 {dimension_numbers = #tpu.dot_dimension_numbers<[1], [0], [0], [1], [0, 0, 1, 1], [], []>} : vector<8x8xf32>, vector<8x16xf32>, vector<8x16xf32> -> vector<8x16xf32>
    %98 = arith.addf %97, %60 : vector<8x16xf32>
    %c0_65 = arith.constant 0 : index
    %c0_66 = arith.constant 0 : index
    %99 = vector.load %arg16[%c0_65, %c0_66] : memref<16x32xf32, #tpu.memory_space<vmem>>, vector<16x32xf32>
    %cst_67 = arith.constant dense<0.000000e+00> : vector<8x32xf32>
    %100 = tpu.matmul %98, %99, %cst_67 {dimension_numbers = #tpu.dot_dimension_numbers<[1], [0], [0], [1], [0, 0, 1, 1], [], []>} : vector<8x16xf32>, vector<16x32xf32>, vector<8x32xf32> -> vector<8x32xf32>
    %c0_68 = arith.constant 0 : index
    %c0_69 = arith.constant 0 : index
    %c0_70 = arith.constant 0 : index
    %101 = vector.load %arg3[%c0_68, %c0_69, %c0_70] : memref<1x8x16xf32, #tpu.memory_space<vmem>>, vector<1x8x16xf32>
    %102 = vector.shape_cast %101 : vector<1x8x16xf32> to vector<8x16xf32>
    %c0_71 = arith.constant 0 : index
    %c0_72 = arith.constant 0 : index
    %103 = vector.load %arg17[%c0_71, %c0_72] : memref<16x32xf32, #tpu.memory_space<vmem>>, vector<16x32xf32>
    %cst_73 = arith.constant dense<0.000000e+00> : vector<8x32xf32>
    %104 = tpu.matmul %102, %103, %cst_73 {dimension_numbers = #tpu.dot_dimension_numbers<[1], [0], [0], [1], [0, 0, 1, 1], [], []>} : vector<8x16xf32>, vector<16x32xf32>, vector<8x32xf32> -> vector<8x32xf32>
    %105 = arith.addf %100, %104 : vector<8x32xf32>
    %c0_74 = arith.constant 0 : index
    %c0_75 = arith.constant 0 : index
    %106 = vector.load %arg18[%c0_74, %c0_75] : memref<1x32xf32, #tpu.memory_space<vmem>>, vector<1x32xf32>
    %107 = vector.broadcast %106 : vector<1x32xf32> to vector<8x32xf32>
    %108 = arith.addf %105, %107 : vector<8x32xf32>
    %cst_76 = arith.constant 0.000000e+00 : f32
    %109 = vector.broadcast %cst_76 : f32 to vector<8x32xf32>
    %110 = arith.maximumf %108, %109 : vector<8x32xf32>
    %c0_77 = arith.constant 0 : index
    %c0_78 = arith.constant 0 : index
    %111 = vector.load %arg19[%c0_77, %c0_78] : memref<32x32xf32, #tpu.memory_space<vmem>>, vector<32x32xf32>
    %cst_79 = arith.constant dense<0.000000e+00> : vector<8x32xf32>
    %112 = tpu.matmul %110, %111, %cst_79 {dimension_numbers = #tpu.dot_dimension_numbers<[1], [0], [0], [1], [0, 0, 1, 1], [], []>} : vector<8x32xf32>, vector<32x32xf32>, vector<8x32xf32> -> vector<8x32xf32>
    %c0_80 = arith.constant 0 : index
    %c0_81 = arith.constant 0 : index
    %113 = vector.load %arg20[%c0_80, %c0_81] : memref<1x32xf32, #tpu.memory_space<vmem>>, vector<1x32xf32>
    %114 = vector.broadcast %113 : vector<1x32xf32> to vector<8x32xf32>
    %115 = arith.addf %112, %114 : vector<8x32xf32>
    %cst_82 = arith.constant 0.000000e+00 : f32
    %116 = vector.broadcast %cst_82 : f32 to vector<8x32xf32>
    %117 = arith.maximumf %115, %116 : vector<8x32xf32>
    %c0_83 = arith.constant 0 : index
    %c0_84 = arith.constant 0 : index
    %118 = vector.load %arg21[%c0_83, %c0_84] : memref<32x2xf32, #tpu.memory_space<vmem>>, vector<32x2xf32>
    %cst_85 = arith.constant dense<0.000000e+00> : vector<8x2xf32>
    %119 = tpu.matmul %117, %118, %cst_85 {dimension_numbers = #tpu.dot_dimension_numbers<[1], [0], [0], [1], [0, 0, 1, 1], [], []>} : vector<8x32xf32>, vector<32x2xf32>, vector<8x2xf32> -> vector<8x2xf32>
    %c0_86 = arith.constant 0 : index
    %c0_87 = arith.constant 0 : index
    %120 = vector.load %arg22[%c0_86, %c0_87] : memref<1x2xf32, #tpu.memory_space<vmem>>, vector<1x2xf32>
    %121 = vector.broadcast %120 : vector<1x2xf32> to vector<8x2xf32>
    %122 = arith.addf %119, %121 : vector<8x2xf32>
    %c0_88 = arith.constant 0 : index
    %c0_89 = arith.constant 0 : index
    %c0_90 = arith.constant 0 : index
    %123 = vector.load %arg23[%c0_88, %c0_89, %c0_90] : memref<1x8x2xf32, #tpu.memory_space<vmem>>, vector<1x8x2xf32>
    %124 = vector.shape_cast %123 : vector<1x8x2xf32> to vector<8x2xf32>
    %125 = vector.shape_cast %122 : vector<8x2xf32> to vector<1x8x2xf32>
    tpu.vector_store %arg23[%c0_88, %c0_89, %c0_90], %125 {strides = array<i32>} : memref<1x8x2xf32, #tpu.memory_space<vmem>>, vector<1x8x2xf32>,
    return
  }
  func.func @transform_0(%arg0: i32) -> (i32, i32, i32) {
    %c0_i32 = arith.constant 0 : i32
    %c0_i32_0 = arith.constant 0 : i32
    %c0_i32_1 = arith.constant 0 : i32
    return %arg0, %c0_i32, %c0_i32_0 : i32, i32, i32
  }
  func.func @transform_1(%arg0: i32) -> (i32, i32, i32) {
    %c0_i32 = arith.constant 0 : i32
    %c0_i32_0 = arith.constant 0 : i32
    %c0_i32_1 = arith.constant 0 : i32
    return %arg0, %c0_i32, %c0_i32_0 : i32, i32, i32
  }
  func.func @transform_2(%arg0: i32) -> (i32, i32, i32) {
    %c0_i32 = arith.constant 0 : i32
    %c0_i32_0 = arith.constant 0 : i32
    %c0_i32_1 = arith.constant 0 : i32
    return %arg0, %c0_i32, %c0_i32_0 : i32, i32, i32
  }
  func.func @transform_3(%arg0: i32) -> (i32, i32) {
    %c0_i32 = arith.constant 0 : i32
    %c0_i32_0 = arith.constant 0 : i32
    %c0_i32_1 = arith.constant 0 : i32
    return %c0_i32, %c0_i32_0 : i32, i32
  }
  func.func @transform_4(%arg0: i32) -> (i32, i32) {
    %c0_i32 = arith.constant 0 : i32
    %c0_i32_0 = arith.constant 0 : i32
    %c0_i32_1 = arith.constant 0 : i32
    return %c0_i32, %c0_i32_0 : i32, i32
  }
  func.func @transform_5(%arg0: i32) -> (i32, i32) {
    %c0_i32 = arith.constant 0 : i32
    %c0_i32_0 = arith.constant 0 : i32
    %c0_i32_1 = arith.constant 0 : i32
    return %c0_i32, %c0_i32_0 : i32, i32
  }
  func.func @transform_6(%arg0: i32) -> (i32, i32) {
    %c0_i32 = arith.constant 0 : i32
    %c0_i32_0 = arith.constant 0 : i32
    %c0_i32_1 = arith.constant 0 : i32
    return %c0_i32, %c0_i32_0 : i32, i32
  }
  func.func @transform_7(%arg0: i32) -> (i32, i32) {
    %c0_i32 = arith.constant 0 : i32
    %c0_i32_0 = arith.constant 0 : i32
    %c0_i32_1 = arith.constant 0 : i32
    return %c0_i32, %c0_i32_0 : i32, i32
  }
  func.func @transform_8(%arg0: i32) -> (i32, i32) {
    %c0_i32 = arith.constant 0 : i32
    %c0_i32_0 = arith.constant 0 : i32
    %c0_i32_1 = arith.constant 0 : i32
    return %c0_i32, %c0_i32_0 : i32, i32
  }
  func.func @transform_9(%arg0: i32) -> (i32, i32) {
    %c0_i32 = arith.constant 0 : i32
    %c0_i32_0 = arith.constant 0 : i32
    %c0_i32_1 = arith.constant 0 : i32
    return %c0_i32, %c0_i32_0 : i32, i32
  }
  func.func @transform_10(%arg0: i32) -> (i32, i32) {
    %c0_i32 = arith.constant 0 : i32
    %c0_i32_0 = arith.constant 0 : i32
    %c0_i32_1 = arith.constant 0 : i32
    return %c0_i32, %c0_i32_0 : i32, i32
  }
  func.func @transform_11(%arg0: i32) -> (i32, i32) {
    %c0_i32 = arith.constant 0 : i32
    %c0_i32_0 = arith.constant 0 : i32
    %c0_i32_1 = arith.constant 0 : i32
    return %c0_i32, %c0_i32_0 : i32, i32
  }
  func.func @transform_12(%arg0: i32) -> (i32, i32) {
    %c0_i32 = arith.constant 0 : i32
    %c0_i32_0 = arith.constant 0 : i32
    %c0_i32_1 = arith.constant 0 : i32
    return %c0_i32, %c0_i32_0 : i32, i32
  }
  func.func @transform_13(%arg0: i32) -> (i32, i32) {
    %c0_i32 = arith.constant 0 : i32
    %c0_i32_0 = arith.constant 0 : i32
    %c0_i32_1 = arith.constant 0 : i32
    return %c0_i32, %c0_i32_0 : i32, i32
  }
  func.func @transform_14(%arg0: i32) -> (i32, i32) {
    %c0_i32 = arith.constant 0 : i32
    %c0_i32_0 = arith.constant 0 : i32
    %c0_i32_1 = arith.constant 0 : i32
    return %c0_i32, %c0_i32_0 : i32, i32
  }
  func.func @transform_15(%arg0: i32) -> (i32, i32) {
    %c0_i32 = arith.constant 0 : i32
    %c0_i32_0 = arith.constant 0 : i32
    %c0_i32_1 = arith.constant 0 : i32
    return %c0_i32, %c0_i32_0 : i32, i32
  }
  func.func @transform_16(%arg0: i32) -> (i32, i32) {
    %c0_i32 = arith.constant 0 : i32
    %c0_i32_0 = arith.constant 0 : i32
    %c0_i32_1 = arith.constant 0 : i32
    return %c0_i32, %c0_i32_0 : i32, i32
  }
  func.func @transform_17(%arg0: i32) -> (i32, i32) {
    %c0_i32 = arith.constant 0 : i32
    %c0_i32_0 = arith.constant 0 : i32
    %c0_i32_1 = arith.constant 0 : i32
    return %c0_i32, %c0_i32_0 : i32, i32
  }
  func.func @transform_18(%arg0: i32) -> (i32, i32) {
    %c0_i32 = arith.constant 0 : i32
    %c0_i32_0 = arith.constant 0 : i32
    %c0_i32_1 = arith.constant 0 : i32
    return %c0_i32, %c0_i32_0 : i32, i32
  }
  func.func @transform_19(%arg0: i32) -> (i32, i32) {
    %c0_i32 = arith.constant 0 : i32
    %c0_i32_0 = arith.constant 0 : i32
    %c0_i32_1 = arith.constant 0 : i32
    return %c0_i32, %c0_i32_0 : i32, i32
  }
  func.func @transform_20(%arg0: i32) -> (i32, i32) {
    %c0_i32 = arith.constant 0 : i32
    %c0_i32_0 = arith.constant 0 : i32
    %c0_i32_1 = arith.constant 0 : i32
    return %c0_i32, %c0_i32_0 : i32, i32
  }
  func.func @transform_21(%arg0: i32) -> (i32, i32) {
    %c0_i32 = arith.constant 0 : i32
    %c0_i32_0 = arith.constant 0 : i32
    %c0_i32_1 = arith.constant 0 : i32
    return %c0_i32, %c0_i32_0 : i32, i32
  }
  func.func @transform_22(%arg0: i32) -> (i32, i32, i32) {
    %c0_i32 = arith.constant 0 : i32
    %c0_i32_0 = arith.constant 0 : i32
    %c0_i32_1 = arith.constant 0 : i32
    return %arg0, %c0_i32, %c0_i32_0 : i32, i32, i32
  }
}

</mosaic_0001>

<llo_original>
// kernel: tpu_custom_call.1
$region0: #{tpu_custom_call.1}
  #allocation0 [shape = 'u32[]', space=smem, size = 0x4, offset = 0x4, fixed_abs, tag = 'smem constant byte address 0x4 - core index']
  #allocation1 [shape = 'u32[72,128]{1,0:T(1,128)}', space=vmem, size = 0x9000, scoped, tag = 'internal scratch']
  %s0 = inlined_call_operand.vmem [shape: f32[4,8,16], index: 0, kind: input, shape index: {}]
  %s1 = inlined_call_operand.vmem [shape: f32[4,8,8], index: 1, kind: input, shape index: {}]
  %s2 = inlined_call_operand.hbm [shape: f32[4,8,16], index: 2, kind: input, shape index: {}]
  %s3 = inlined_call_operand.vmem [shape: f32[16,32], index: 3, kind: input, shape index: {}]
  %s4 = inlined_call_operand.vmem [shape: f32[1,32], index: 4, kind: input, shape index: {}]
  %s5 = inlined_call_operand.hbm [shape: f32[32,32], index: 5, kind: input, shape index: {}]
  %s6 = inlined_call_operand.vmem [shape: f32[1,32], index: 6, kind: input, shape index: {}]
  %s7 = inlined_call_operand.vmem [shape: f32[32,16], index: 7, kind: input, shape index: {}]
  %s8 = inlined_call_operand.vmem [shape: f32[1,16], index: 8, kind: input, shape index: {}]
  %s9 = inlined_call_operand.hbm [shape: f32[16,96], index: 9, kind: input, shape index: {}]
  %s10 = inlined_call_operand.vmem [shape: f32[1,96], index: 10, kind: input, shape index: {}]
  %s11 = inlined_call_operand.vmem [shape: f32[96,96], index: 11, kind: input, shape index: {}]
  %s12 = inlined_call_operand.vmem [shape: f32[1,96], index: 12, kind: input, shape index: {}]
  %s13 = inlined_call_operand.vmem [shape: f32[96,48], index: 13, kind: input, shape index: {}]
  %s14 = inlined_call_operand.vmem [shape: f32[1,48], index: 14, kind: input, shape index: {}]
  %s15 = inlined_call_operand.hbm [shape: f32[16,32], index: 15, kind: input, shape index: {}]
  %s16 = inlined_call_operand.hbm [shape: f32[16,32], index: 16, kind: input, shape index: {}]
  %s17 = inlined_call_operand.vmem [shape: f32[1,32], index: 17, kind: input, shape index: {}]
  %s18 = inlined_call_operand.hbm [shape: f32[32,32], index: 18, kind: input, shape index: {}]
  %s19 = inlined_call_operand.vmem [shape: f32[1,32], index: 19, kind: input, shape index: {}]
  %s20 = inlined_call_operand.vmem [shape: f32[32,2], index: 20, kind: input, shape index: {}]
  %s21 = inlined_call_operand.vmem [shape: f32[1,2], index: 21, kind: input, shape index: {}]
  %s22 = inlined_call_operand.vmem [shape: f32[4,8,2], index: 22, kind: output, shape index: {}]
  %s23 = sld [smem:[#allocation0]]
  $region145: #{tpu_custom_call.1} parent=0
    _
  %s25 = ssub.s32 1, %s23
  %s26 = scalar_select 0, %s25, %s23
  $region1: #{tpu_custom_call.1} parent=0
    #allocation2 [shape = 'u8[8192]{0}', space=vmem, size = 0x2000, scoped, tag = 'input window, operand 2']
    #allocation3 [shape = 's32[2]{0}', space=sflag, size = 0x8, scoped, tag = 'scoped memory for tpu_custom_call.1']
    #allocation4 [shape = 'u8[16384]{0}', space=vmem, size = 0x4000, scoped, tag = 'input window, operand 5, single buffered']
    #allocation5 [shape = 's32[1]{0}', space=sflag, size = 0x4, scoped, tag = 'scoped memory for tpu_custom_call.1']
    #allocation6 [shape = 'u8[8192]{0}', space=vmem, size = 0x2000, scoped, tag = 'input window, operand 9, single buffered']
    #allocation7 [shape = 'u8[8192]{0}', space=vmem, size = 0x2000, scoped, tag = 'input window, operand 15, single buffered']
    #allocation8 [shape = 's32[1]{0}', space=sflag, size = 0x4, scoped, tag = 'scoped memory for tpu_custom_call.1']
    #allocation9 [shape = 'u8[8192]{0}', space=vmem, size = 0x2000, scoped, tag = 'input window, operand 16, single buffered']
    #allocation10 [shape = 'u8[16384]{0}', space=vmem, size = 0x4000, scoped, tag = 'input window, operand 18, single buffered']
    #allocation11 [shape = 's32[1]{0}', space=sflag, size = 0x4, scoped, tag = 'scoped memory for tpu_custom_call.1']
    %27 = vsyncpa [#allocation3], 0
    %s28 = scalar_lea.sflag [#allocation3], 1
    %29 = vsyncpa %s28, 0
    %30 = vsyncpa [#allocation5], 0
    %31 = vsyncpa [#allocation8], 0
    %32 = vsyncpa [#allocation11], 0
    loop: start=0, step=1, limit=6
    $region2: #{tpu_custom_call.1} parent=1 // loop_pre_header
      _
    $region3: #{tpu_custom_call.1} parent=1 // loop_header
      %s34 = sphi 0, %s38
      %p35 = scmp.ge.s32.totalorder %s34, 6
      %s44 = sphi 0, %s46
      %s47 = sphi 0, %s44
      %s48 = sphi 0, %s47
      %s64 = sphi 0, %s48
      %s70 = sphi 0, %s72
      %s73 = sphi 0, %s70
      %s74 = sphi 0, %s73
      %s90 = sphi 0, %s74
      %s96 = sphi 0, %s98
      %s99 = sphi 0, %s96
      %s100 = sphi 0, %s99
      %s116 = sphi 0, %s100
      %s120 = sphi 0, %s120
      %s122 = sphi 0, %s120
      %s123 = sphi 0, %s122
      %s137 = sphi 0, %s123
      %s141 = sphi 0, %s141
      %s143 = sphi 0, %s141
      %s144 = sphi 0, %s143
      %s158 = sphi 0, %s144
      %s162 = sphi 0, %s162
      %s164 = sphi 0, %s162
      %s165 = sphi 0, %s164
      %s179 = sphi 0, %s165
      %s183 = sphi 0, %s183
      %s185 = sphi 0, %s183
      %s186 = sphi 0, %s185
      %s200 = sphi 0, %s186
      %s204 = sphi 0, %s204
      %s206 = sphi 0, %s204
      %s207 = sphi 0, %s206
      %s221 = sphi 0, %s207
      %s225 = sphi 0, %s225
      %s227 = sphi 0, %s225
      %s228 = sphi 0, %s227
      %s242 = sphi 0, %s228
      %s246 = sphi 0, %s246
      %s248 = sphi 0, %s246
      %s249 = sphi 0, %s248
      %s263 = sphi 0, %s249
      %s267 = sphi 0, %s267
      %s269 = sphi 0, %s267
      %s270 = sphi 0, %s269
      %s284 = sphi 0, %s270
      %s288 = sphi 0, %s288
      %s290 = sphi 0, %s288
      %s291 = sphi 0, %s290
      %s305 = sphi 0, %s291
      %s309 = sphi 0, %s309
      %s311 = sphi 0, %s309
      %s312 = sphi 0, %s311
      %s326 = sphi 0, %s312
      %s330 = sphi 0, %s330
      %s332 = sphi 0, %s330
      %s333 = sphi 0, %s332
      %s347 = sphi 0, %s333
      %s351 = sphi 0, %s351
      %s353 = sphi 0, %s351
      %s354 = sphi 0, %s353
      %s368 = sphi 0, %s354
      %s372 = sphi 0, %s372
      %s374 = sphi 0, %s372
      %s375 = sphi 0, %s374
      %s389 = sphi 0, %s375
      %s393 = sphi 0, %s393
      %s395 = sphi 0, %s393
      %s396 = sphi 0, %s395
      %s410 = sphi 0, %s396
      %s414 = sphi 0, %s414
      %s416 = sphi 0, %s414
      %s417 = sphi 0, %s416
      %s431 = sphi 0, %s417
      %s435 = sphi 0, %s435
      %s437 = sphi 0, %s435
      %s438 = sphi 0, %s437
      %s452 = sphi 0, %s438
      %s456 = sphi 0, %s456
      %s458 = sphi 0, %s456
      %s459 = sphi 0, %s458
      %s473 = sphi 0, %s459
      %s477 = sphi 0, %s477
      %s479 = sphi 0, %s477
      %s480 = sphi 0, %s479
      %s494 = sphi 0, %s480
      %s498 = sphi 0, %s498
      %s500 = sphi 0, %s498
      %s501 = sphi 0, %s500
      %s515 = sphi 0, %s501
      %s521 = sphi 0, %s523
      %s524 = sphi 0, %s521
      %s525 = sphi 0, %s524
      %s541 = sphi 0, %s525
    $region4: #{tpu_custom_call.1} parent=1 // loop_header_branch
      %37 = sbr.rel (%p35) target = $region8
    $region5: #{tpu_custom_call.1} parent=1 // loop_body
      %s39 = ssub.s32 %s34, 1
      %s40 = ssub.s32 %s34, 2
      %s41 = sadd.s32 %s34, 1
      %s42 = ssub.s32 %s34, %s41
      %p43 = scmp.eq.s32.totalorder %s42, 0
      %s45 = sadd.s32 %s44, 1
      %s46 = scalar_select %p43, %s44, %s45
      %p49 = pneg %p43
      %p50 = scmp.eq.s32.totalorder %s34, 3
      %p51 = por %p49, %p50
      %p52 = scmp.ne.s32.totalorder %s44, %s47
      %p53 = scmp.eq.s32.totalorder %s34, 0
      %p54 = por %p52, %p53
      %p55 = scmp.ne.s32.totalorder %s44, %s47
      %p56 = scmp.eq.s32.totalorder %s39, 3
      %p57 = por %p55, %p56
      %p58 = scmp.ne.s32.totalorder %s47, %s48
      %p59 = scmp.eq.s32.totalorder %s39, 0
      %p60 = por %p58, %p59
      %p61 = scmp.ne.s32.totalorder %s47, %s48
      %p62 = scmp.eq.s32.totalorder %s40, 3
      %p63 = por %p61, %p62
      %p65 = scmp.ne.s32.totalorder %s48, %s64
      %p66 = scmp.eq.s32.totalorder %s40, 0
      %p67 = por %p65, %p66
      %s68 = ssub.s32 %s34, %s41
      %p69 = scmp.eq.s32.totalorder %s68, 0
      %s71 = sadd.s32 %s70, 1
      %s72 = scalar_select %p69, %s70, %s71
      %p75 = pneg %p69
      %p76 = scmp.eq.s32.totalorder %s34, 3
      %p77 = por %p75, %p76
      %p78 = scmp.ne.s32.totalorder %s70, %s73
      %p79 = scmp.eq.s32.totalorder %s34, 0
      %p80 = por %p78, %p79
      %p81 = scmp.ne.s32.totalorder %s70, %s73
      %p82 = scmp.eq.s32.totalorder %s39, 3
      %p83 = por %p81, %p82
      %p84 = scmp.ne.s32.totalorder %s73, %s74
      %p85 = scmp.eq.s32.totalorder %s39, 0
      %p86 = por %p84, %p85
      %p87 = scmp.ne.s32.totalorder %s73, %s74
      %p88 = scmp.eq.s32.totalorder %s40, 3
      %p89 = por %p87, %p88
      %p91 = scmp.ne.s32.totalorder %s74, %s90
      %p92 = scmp.eq.s32.totalorder %s40, 0
      %p93 = por %p91, %p92
      %s94 = ssub.s32 %s34, %s41
      %p95 = scmp.eq.s32.totalorder %s94, 0
      %s97 = sadd.s32 %s96, 1
      %s98 = scalar_select %p95, %s96, %s97
      %p101 = pneg %p95
      %p102 = scmp.eq.s32.totalorder %s34, 3
      %p103 = por %p101, %p102
      %p104 = scmp.ne.s32.totalorder %s96, %s99
      %p105 = scmp.eq.s32.totalorder %s34, 0
      %p106 = por %p104, %p105
      %p107 = scmp.ne.s32.totalorder %s96, %s99
      %p108 = scmp.eq.s32.totalorder %s39, 3
      %p109 = por %p107, %p108
      %p110 = scmp.ne.s32.totalorder %s99, %s100
      %p111 = scmp.eq.s32.totalorder %s39, 0
      %p112 = por %p110, %p111
      %p113 = scmp.ne.s32.totalorder %s99, %s100
      %p114 = scmp.eq.s32.totalorder %s40, 3
      %p115 = por %p113, %p114
      %p117 = scmp.ne.s32.totalorder %s100, %s116
      %p118 = scmp.eq.s32.totalorder %s40, 0
      %p119 = por %p117, %p118
      %s121 = sadd.s32 %s120, 1
      %p124 = scmp.eq.s32.totalorder %s34, 3
      %p125 = scmp.ne.s32.totalorder %s120, %s122
      %p126 = scmp.eq.s32.totalorder %s34, 0
      %p127 = por %p125, %p126
      %p128 = scmp.ne.s32.totalorder %s120, %s122
      %p129 = scmp.eq.s32.totalorder %s39, 3
      %p130 = por %p128, %p129
      %p131 = scmp.ne.s32.totalorder %s122, %s123
      %p132 = scmp.eq.s32.totalorder %s39, 0
      %p133 = por %p131, %p132
      %p134 = scmp.ne.s32.totalorder %s122, %s123
      %p135 = scmp.eq.s32.totalorder %s40, 3
      %p136 = por %p134, %p135
      %p138 = scmp.ne.s32.totalorder %s123, %s137
      %p139 = scmp.eq.s32.totalorder %s40, 0
      %p140 = por %p138, %p139
      %s142 = sadd.s32 %s141, 1
      %p145 = scmp.eq.s32.totalorder %s34, 3
      %p146 = scmp.ne.s32.totalorder %s141, %s143
      %p147 = scmp.eq.s32.totalorder %s34, 0
      %p148 = por %p146, %p147
      %p149 = scmp.ne.s32.totalorder %s141, %s143
      %p150 = scmp.eq.s32.totalorder %s39, 3
      %p151 = por %p149, %p150
      %p152 = scmp.ne.s32.totalorder %s143, %s144
      %p153 = scmp.eq.s32.totalorder %s39, 0
      %p154 = por %p152, %p153
      %p155 = scmp.ne.s32.totalorder %s143, %s144
      %p156 = scmp.eq.s32.totalorder %s40, 3
      %p157 = por %p155, %p156
      %p159 = scmp.ne.s32.totalorder %s144, %s158
      %p160 = scmp.eq.s32.totalorder %s40, 0
      %p161 = por %p159, %p160
      %s163 = sadd.s32 %s162, 1
      %p166 = scmp.eq.s32.totalorder %s34, 3
      %p167 = scmp.ne.s32.totalorder %s162, %s164
      %p168 = scmp.eq.s32.totalorder %s34, 0
      %p169 = por %p167, %p168
      %p170 = scmp.ne.s32.totalorder %s162, %s164
      %p171 = scmp.eq.s32.totalorder %s39, 3
      %p172 = por %p170, %p171
      %p173 = scmp.ne.s32.totalorder %s164, %s165
      %p174 = scmp.eq.s32.totalorder %s39, 0
      %p175 = por %p173, %p174
      %p176 = scmp.ne.s32.totalorder %s164, %s165
      %p177 = scmp.eq.s32.totalorder %s40, 3
      %p178 = por %p176, %p177
      %p180 = scmp.ne.s32.totalorder %s165, %s179
      %p181 = scmp.eq.s32.totalorder %s40, 0
      %p182 = por %p180, %p181
      %s184 = sadd.s32 %s183, 1
      %p187 = scmp.eq.s32.totalorder %s34, 3
      %p188 = scmp.ne.s32.totalorder %s183, %s185
      %p189 = scmp.eq.s32.totalorder %s34, 0
      %p190 = por %p188, %p189
      %p191 = scmp.ne.s32.totalorder %s183, %s185
      %p192 = scmp.eq.s32.totalorder %s39, 3
      %p193 = por %p191, %p192
      %p194 = scmp.ne.s32.totalorder %s185, %s186
      %p195 = scmp.eq.s32.totalorder %s39, 0
      %p196 = por %p194, %p195
      %p197 = scmp.ne.s32.totalorder %s185, %s186
      %p198 = scmp.eq.s32.totalorder %s40, 3
      %p199 = por %p197, %p198
      %p201 = scmp.ne.s32.totalorder %s186, %s200
      %p202 = scmp.eq.s32.totalorder %s40, 0
      %p203 = por %p201, %p202
      %s205 = sadd.s32 %s204, 1
      %p208 = scmp.eq.s32.totalorder %s34, 3
      %p209 = scmp.ne.s32.totalorder %s204, %s206
      %p210 = scmp.eq.s32.totalorder %s34, 0
      %p211 = por %p209, %p210
      %p212 = scmp.ne.s32.totalorder %s204, %s206
      %p213 = scmp.eq.s32.totalorder %s39, 3
      %p214 = por %p212, %p213
      %p215 = scmp.ne.s32.totalorder %s206, %s207
      %p216 = scmp.eq.s32.totalorder %s39, 0
      %p217 = por %p215, %p216
      %p218 = scmp.ne.s32.totalorder %s206, %s207
      %p219 = scmp.eq.s32.totalorder %s40, 3
      %p220 = por %p218, %p219
      %p222 = scmp.ne.s32.totalorder %s207, %s221
      %p223 = scmp.eq.s32.totalorder %s40, 0
      %p224 = por %p222, %p223
      %s226 = sadd.s32 %s225, 1
      %p229 = scmp.eq.s32.totalorder %s34, 3
      %p230 = scmp.ne.s32.totalorder %s225, %s227
      %p231 = scmp.eq.s32.totalorder %s34, 0
      %p232 = por %p230, %p231
      %p233 = scmp.ne.s32.totalorder %s225, %s227
      %p234 = scmp.eq.s32.totalorder %s39, 3
      %p235 = por %p233, %p234
      %p236 = scmp.ne.s32.totalorder %s227, %s228
      %p237 = scmp.eq.s32.totalorder %s39, 0
      %p238 = por %p236, %p237
      %p239 = scmp.ne.s32.totalorder %s227, %s228
      %p240 = scmp.eq.s32.totalorder %s40, 3
      %p241 = por %p239, %p240
      %p243 = scmp.ne.s32.totalorder %s228, %s242
      %p244 = scmp.eq.s32.totalorder %s40, 0
      %p245 = por %p243, %p244
      %s247 = sadd.s32 %s246, 1
      %p250 = scmp.eq.s32.totalorder %s34, 3
      %p251 = scmp.ne.s32.totalorder %s246, %s248
      %p252 = scmp.eq.s32.totalorder %s34, 0
      %p253 = por %p251, %p252
      %p254 = scmp.ne.s32.totalorder %s246, %s248
      %p255 = scmp.eq.s32.totalorder %s39, 3
      %p256 = por %p254, %p255
      %p257 = scmp.ne.s32.totalorder %s248, %s249
      %p258 = scmp.eq.s32.totalorder %s39, 0
      %p259 = por %p257, %p258
      %p260 = scmp.ne.s32.totalorder %s248, %s249
      %p261 = scmp.eq.s32.totalorder %s40, 3
      %p262 = por %p260, %p261
      %p264 = scmp.ne.s32.totalorder %s249, %s263
      %p265 = scmp.eq.s32.totalorder %s40, 0
      %p266 = por %p264, %p265
      %s268 = sadd.s32 %s267, 1
      %p271 = scmp.eq.s32.totalorder %s34, 3
      %p272 = scmp.ne.s32.totalorder %s267, %s269
      %p273 = scmp.eq.s32.totalorder %s34, 0
      %p274 = por %p272, %p273
      %p275 = scmp.ne.s32.totalorder %s267, %s269
      %p276 = scmp.eq.s32.totalorder %s39, 3
      %p277 = por %p275, %p276
      %p278 = scmp.ne.s32.totalorder %s269, %s270
      %p279 = scmp.eq.s32.totalorder %s39, 0
      %p280 = por %p278, %p279
      %p281 = scmp.ne.s32.totalorder %s269, %s270
      %p282 = scmp.eq.s32.totalorder %s40, 3
      %p283 = por %p281, %p282
      %p285 = scmp.ne.s32.totalorder %s270, %s284
      %p286 = scmp.eq.s32.totalorder %s40, 0
      %p287 = por %p285, %p286
      %s289 = sadd.s32 %s288, 1
      %p292 = scmp.eq.s32.totalorder %s34, 3
      %p293 = scmp.ne.s32.totalorder %s288, %s290
      %p294 = scmp.eq.s32.totalorder %s34, 0
      %p295 = por %p293, %p294
      %p296 = scmp.ne.s32.totalorder %s288, %s290
      %p297 = scmp.eq.s32.totalorder %s39, 3
      %p298 = por %p296, %p297
      %p299 = scmp.ne.s32.totalorder %s290, %s291
      %p300 = scmp.eq.s32.totalorder %s39, 0
      %p301 = por %p299, %p300
      %p302 = scmp.ne.s32.totalorder %s290, %s291
      %p303 = scmp.eq.s32.totalorder %s40, 3
      %p304 = por %p302, %p303
      %p306 = scmp.ne.s32.totalorder %s291, %s305
      %p307 = scmp.eq.s32.totalorder %s40, 0
      %p308 = por %p306, %p307
      %s310 = sadd.s32 %s309, 1
      %p313 = scmp.eq.s32.totalorder %s34, 3
      %p314 = scmp.ne.s32.totalorder %s309, %s311
      %p315 = scmp.eq.s32.totalorder %s34, 0
      %p316 = por %p314, %p315
      %p317 = scmp.ne.s32.totalorder %s309, %s311
      %p318 = scmp.eq.s32.totalorder %s39, 3
      %p319 = por %p317, %p318
      %p320 = scmp.ne.s32.totalorder %s311, %s312
      %p321 = scmp.eq.s32.totalorder %s39, 0
      %p322 = por %p320, %p321
      %p323 = scmp.ne.s32.totalorder %s311, %s312
      %p324 = scmp.eq.s32.totalorder %s40, 3
      %p325 = por %p323, %p324
      %p327 = scmp.ne.s32.totalorder %s312, %s326
      %p328 = scmp.eq.s32.totalorder %s40, 0
      %p329 = por %p327, %p328
      %s331 = sadd.s32 %s330, 1
      %p334 = scmp.eq.s32.totalorder %s34, 3
      %p335 = scmp.ne.s32.totalorder %s330, %s332
      %p336 = scmp.eq.s32.totalorder %s34, 0
      %p337 = por %p335, %p336
      %p338 = scmp.ne.s32.totalorder %s330, %s332
      %p339 = scmp.eq.s32.totalorder %s39, 3
      %p340 = por %p338, %p339
      %p341 = scmp.ne.s32.totalorder %s332, %s333
      %p342 = scmp.eq.s32.totalorder %s39, 0
      %p343 = por %p341, %p342
      %p344 = scmp.ne.s32.totalorder %s332, %s333
      %p345 = scmp.eq.s32.totalorder %s40, 3
      %p346 = por %p344, %p345
      %p348 = scmp.ne.s32.totalorder %s333, %s347
      %p349 = scmp.eq.s32.totalorder %s40, 0
      %p350 = por %p348, %p349
      %s352 = sadd.s32 %s351, 1
      %p355 = scmp.eq.s32.totalorder %s34, 3
      %p356 = scmp.ne.s32.totalorder %s351, %s353
      %p357 = scmp.eq.s32.totalorder %s34, 0
      %p358 = por %p356, %p357
      %p359 = scmp.ne.s32.totalorder %s351, %s353
      %p360 = scmp.eq.s32.totalorder %s39, 3
      %p361 = por %p359, %p360
      %p362 = scmp.ne.s32.totalorder %s353, %s354
      %p363 = scmp.eq.s32.totalorder %s39, 0
      %p364 = por %p362, %p363
      %p365 = scmp.ne.s32.totalorder %s353, %s354
      %p366 = scmp.eq.s32.totalorder %s40, 3
      %p367 = por %p365, %p366
      %p369 = scmp.ne.s32.totalorder %s354, %s368
      %p370 = scmp.eq.s32.totalorder %s40, 0
      %p371 = por %p369, %p370
      %s373 = sadd.s32 %s372, 1
      %p376 = scmp.eq.s32.totalorder %s34, 3
      %p377 = scmp.ne.s32.totalorder %s372, %s374
      %p378 = scmp.eq.s32.totalorder %s34, 0
      %p379 = por %p377, %p378
      %p380 = scmp.ne.s32.totalorder %s372, %s374
      %p381 = scmp.eq.s32.totalorder %s39, 3
      %p382 = por %p380, %p381
      %p383 = scmp.ne.s32.totalorder %s374, %s375
      %p384 = scmp.eq.s32.totalorder %s39, 0
      %p385 = por %p383, %p384
      %p386 = scmp.ne.s32.totalorder %s374, %s375
      %p387 = scmp.eq.s32.totalorder %s40, 3
      %p388 = por %p386, %p387
      %p390 = scmp.ne.s32.totalorder %s375, %s389
      %p391 = scmp.eq.s32.totalorder %s40, 0
      %p392 = por %p390, %p391
      %s394 = sadd.s32 %s393, 1
      %p397 = scmp.eq.s32.totalorder %s34, 3
      %p398 = scmp.ne.s32.totalorder %s393, %s395
      %p399 = scmp.eq.s32.totalorder %s34, 0
      %p400 = por %p398, %p399
      %p401 = scmp.ne.s32.totalorder %s393, %s395
      %p402 = scmp.eq.s32.totalorder %s39, 3
      %p403 = por %p401, %p402
      %p404 = scmp.ne.s32.totalorder %s395, %s396
      %p405 = scmp.eq.s32.totalorder %s39, 0
      %p406 = por %p404, %p405
      %p407 = scmp.ne.s32.totalorder %s395, %s396
      %p408 = scmp.eq.s32.totalorder %s40, 3
      %p409 = por %p407, %p408
      %p411 = scmp.ne.s32.totalorder %s396, %s410
      %p412 = scmp.eq.s32.totalorder %s40, 0
      %p413 = por %p411, %p412
      %s415 = sadd.s32 %s414, 1
      %p418 = scmp.eq.s32.totalorder %s34, 3
      %p419 = scmp.ne.s32.totalorder %s414, %s416
      %p420 = scmp.eq.s32.totalorder %s34, 0
      %p421 = por %p419, %p420
      %p422 = scmp.ne.s32.totalorder %s414, %s416
      %p423 = scmp.eq.s32.totalorder %s39, 3
      %p424 = por %p422, %p423
      %p425 = scmp.ne.s32.totalorder %s416, %s417
      %p426 = scmp.eq.s32.totalorder %s39, 0
      %p427 = por %p425, %p426
      %p428 = scmp.ne.s32.totalorder %s416, %s417
      %p429 = scmp.eq.s32.totalorder %s40, 3
      %p430 = por %p428, %p429
      %p432 = scmp.ne.s32.totalorder %s417, %s431
      %p433 = scmp.eq.s32.totalorder %s40, 0
      %p434 = por %p432, %p433
      %s436 = sadd.s32 %s435, 1
      %p439 = scmp.eq.s32.totalorder %s34, 3
      %p440 = scmp.ne.s32.totalorder %s435, %s437
      %p441 = scmp.eq.s32.totalorder %s34, 0
      %p442 = por %p440, %p441
      %p443 = scmp.ne.s32.totalorder %s435, %s437
      %p444 = scmp.eq.s32.totalorder %s39, 3
      %p445 = por %p443, %p444
      %p446 = scmp.ne.s32.totalorder %s437, %s438
      %p447 = scmp.eq.s32.totalorder %s39, 0
      %p448 = por %p446, %p447
      %p449 = scmp.ne.s32.totalorder %s437, %s438
      %p450 = scmp.eq.s32.totalorder %s40, 3
      %p451 = por %p449, %p450
      %p453 = scmp.ne.s32.totalorder %s438, %s452
      %p454 = scmp.eq.s32.totalorder %s40, 0
      %p455 = por %p453, %p454
      %s457 = sadd.s32 %s456, 1
      %p460 = scmp.eq.s32.totalorder %s34, 3
      %p461 = scmp.ne.s32.totalorder %s456, %s458
      %p462 = scmp.eq.s32.totalorder %s34, 0
      %p463 = por %p461, %p462
      %p464 = scmp.ne.s32.totalorder %s456, %s458
      %p465 = scmp.eq.s32.totalorder %s39, 3
      %p466 = por %p464, %p465
      %p467 = scmp.ne.s32.totalorder %s458, %s459
      %p468 = scmp.eq.s32.totalorder %s39, 0
      %p469 = por %p467, %p468
      %p470 = scmp.ne.s32.totalorder %s458, %s459
      %p471 = scmp.eq.s32.totalorder %s40, 3
      %p472 = por %p470, %p471
      %p474 = scmp.ne.s32.totalorder %s459, %s473
      %p475 = scmp.eq.s32.totalorder %s40, 0
      %p476 = por %p474, %p475
      %s478 = sadd.s32 %s477, 1
      %p481 = scmp.eq.s32.totalorder %s34, 3
      %p482 = scmp.ne.s32.totalorder %s477, %s479
      %p483 = scmp.eq.s32.totalorder %s34, 0
      %p484 = por %p482, %p483
      %p485 = scmp.ne.s32.totalorder %s477, %s479
      %p486 = scmp.eq.s32.totalorder %s39, 3
      %p487 = por %p485, %p486
      %p488 = scmp.ne.s32.totalorder %s479, %s480
      %p489 = scmp.eq.s32.totalorder %s39, 0
      %p490 = por %p488, %p489
      %p491 = scmp.ne.s32.totalorder %s479, %s480
      %p492 = scmp.eq.s32.totalorder %s40, 3
      %p493 = por %p491, %p492
      %p495 = scmp.ne.s32.totalorder %s480, %s494
      %p496 = scmp.eq.s32.totalorder %s40, 0
      %p497 = por %p495, %p496
      %s499 = sadd.s32 %s498, 1
      %p502 = scmp.eq.s32.totalorder %s34, 3
      %p503 = scmp.ne.s32.totalorder %s498, %s500
      %p504 = scmp.eq.s32.totalorder %s34, 0
      %p505 = por %p503, %p504
      %p506 = scmp.ne.s32.totalorder %s498, %s500
      %p507 = scmp.eq.s32.totalorder %s39, 3
      %p508 = por %p506, %p507
      %p509 = scmp.ne.s32.totalorder %s500, %s501
      %p510 = scmp.eq.s32.totalorder %s39, 0
      %p511 = por %p509, %p510
      %p512 = scmp.ne.s32.totalorder %s500, %s501
      %p513 = scmp.eq.s32.totalorder %s40, 3
      %p514 = por %p512, %p513
      %p516 = scmp.ne.s32.totalorder %s501, %s515
      %p517 = scmp.eq.s32.totalorder %s40, 0
      %p518 = por %p516, %p517
      %s519 = ssub.s32 %s34, %s41
      %p520 = scmp.eq.s32.totalorder %s519, 0
      %s522 = sadd.s32 %s521, 1
      %s523 = scalar_select %p520, %s521, %s522
      %p526 = pneg %p520
      %p527 = scmp.eq.s32.totalorder %s34, 3
      %p528 = por %p526, %p527
      %p529 = scmp.ne.s32.totalorder %s521, %s524
      %p530 = scmp.eq.s32.totalorder %s34, 0
      %p531 = por %p529, %p530
      %p532 = scmp.ne.s32.totalorder %s521, %s524
      %p533 = scmp.eq.s32.totalorder %s39, 3
      %p534 = por %p532, %p533
      %p535 = scmp.ne.s32.totalorder %s524, %s525
      %p536 = scmp.eq.s32.totalorder %s39, 0
      %p537 = por %p535, %p536
      %p538 = scmp.ne.s32.totalorder %s524, %s525
      %p539 = scmp.eq.s32.totalorder %s40, 3
      %p540 = por %p538, %p539
      %p542 = scmp.ne.s32.totalorder %s525, %s541
      %p543 = scmp.eq.s32.totalorder %s40, 0
      %p544 = por %p542, %p543
      %p545 = scmp.le.s32.totalorder 1, %s34
      %p546 = scmp.lt.s32.totalorder %s34, 5
      %p547 = pnand %p545, %p546
      %p548 = pneg %p547
      // Predicated region
      $region9: #{tpu_custom_call.1} parent=5 // pred_check
        _
      $region10: #{tpu_custom_call.1} parent=5 // pred_check_branch
        %550 = sbr.rel (%p547) target = $region12
      $region11: #{tpu_custom_call.1} parent=5 // pred_region
        %s551 = ssub.s32 %s34, 1
        // Predicated region
        $region13: #{tpu_custom_call.1} parent=11 // pred_check
          %p552 = pneg %p133
        $region14: #{tpu_custom_call.1} parent=11 // pred_check_branch
          %554 = sbr.rel (%p552) target = $region16
        $region15: #{tpu_custom_call.1} parent=11 // pred_region
          _
        $region16: #{tpu_custom_call.1} parent=11 // pred_fallthru
          _
        // Predicated region
        $region17: #{tpu_custom_call.1} parent=11 // pred_check
          %p555 = pneg %p154
        $region18: #{tpu_custom_call.1} parent=11 // pred_check_branch
          %557 = sbr.rel (%p555) target = $region20
        $region19: #{tpu_custom_call.1} parent=11 // pred_region
          _
        $region20: #{tpu_custom_call.1} parent=11 // pred_fallthru
          _
        // Predicated region
        $region21: #{tpu_custom_call.1} parent=11 // pred_check
          %p558 = pneg %p175
        $region22: #{tpu_custom_call.1} parent=11 // pred_check_branch
          %560 = sbr.rel (%p558) target = $region24
        $region23: #{tpu_custom_call.1} parent=11 // pred_region
          %562 = vsyncadd [#allocation5], 0
          %s563 = sshll.u32 %s5, 4
          %s564 = int_to_ptr.hbm [resolvable:$true] %s563
          %s565 = sshll.u32 [#allocation4], 4
          %s566 = int_to_ptr.vmem [resolvable:$true] %s565
          %571 = dma.hbm_to_vmem [thread:$0]  %s564, 512, %s566, [#allocation5], 128, 128, 8
        $region24: #{tpu_custom_call.1} parent=11 // pred_fallthru
          _
        // Predicated region
        $region25: #{tpu_custom_call.1} parent=11 // pred_check
          %p572 = pneg %p196
        $region26: #{tpu_custom_call.1} parent=11 // pred_check_branch
          %574 = sbr.rel (%p572) target = $region28
        $region27: #{tpu_custom_call.1} parent=11 // pred_region
          _
        $region28: #{tpu_custom_call.1} parent=11 // pred_fallthru
          _
        // Predicated region
        $region29: #{tpu_custom_call.1} parent=11 // pred_check
          %p575 = pneg %p217
        $region30: #{tpu_custom_call.1} parent=11 // pred_check_branch
          %577 = sbr.rel (%p575) target = $region32
        $region31: #{tpu_custom_call.1} parent=11 // pred_region
          _
        $region32: #{tpu_custom_call.1} parent=11 // pred_fallthru
          _
        // Predicated region
        $region33: #{tpu_custom_call.1} parent=11 // pred_check
          %p578 = pneg %p238
        $region34: #{tpu_custom_call.1} parent=11 // pred_check_branch
          %580 = sbr.rel (%p578) target = $region36
        $region35: #{tpu_custom_call.1} parent=11 // pred_region
          _
        $region36: #{tpu_custom_call.1} parent=11 // pred_fallthru
          _
        // Predicated region
        $region37: #{tpu_custom_call.1} parent=11 // pred_check
          %p581 = pneg %p259
        $region38: #{tpu_custom_call.1} parent=11 // pred_check_branch
          %583 = sbr.rel (%p581) target = $region40
        $region39: #{tpu_custom_call.1} parent=11 // pred_region
          %585 = vsyncadd [#allocation5], 0
          %s586 = sshll.u32 %s9, 4
          %s587 = int_to_ptr.hbm [resolvable:$true] %s586
          %s588 = sshll.u32 [#allocation6], 4
          %s589 = int_to_ptr.vmem [resolvable:$true] %s588
          %594 = dma.hbm_to_vmem [thread:$0]  %s587, 256, %s589, [#allocation5], 128, 128, 8
        $region40: #{tpu_custom_call.1} parent=11 // pred_fallthru
          _
        // Predicated region
        $region41: #{tpu_custom_call.1} parent=11 // pred_check
          %p595 = pneg %p280
        $region42: #{tpu_custom_call.1} parent=11 // pred_check_branch
          %597 = sbr.rel (%p595) target = $region44
        $region43: #{tpu_custom_call.1} parent=11 // pred_region
          _
        $region44: #{tpu_custom_call.1} parent=11 // pred_fallthru
          _
        // Predicated region
        $region45: #{tpu_custom_call.1} parent=11 // pred_check
          %p598 = pneg %p301
        $region46: #{tpu_custom_call.1} parent=11 // pred_check_branch
          %600 = sbr.rel (%p598) target = $region48
        $region47: #{tpu_custom_call.1} parent=11 // pred_region
          _
        $region48: #{tpu_custom_call.1} parent=11 // pred_fallthru
          _
        // Predicated region
        $region49: #{tpu_custom_call.1} parent=11 // pred_check
          %p601 = pneg %p322
        $region50: #{tpu_custom_call.1} parent=11 // pred_check_branch
          %603 = sbr.rel (%p601) target = $region52
        $region51: #{tpu_custom_call.1} parent=11 // pred_region
          _
        $region52: #{tpu_custom_call.1} parent=11 // pred_fallthru
          _
        // Predicated region
        $region53: #{tpu_custom_call.1} parent=11 // pred_check
          %p604 = pneg %p343
        $region54: #{tpu_custom_call.1} parent=11 // pred_check_branch
          %606 = sbr.rel (%p604) target = $region56
        $region55: #{tpu_custom_call.1} parent=11 // pred_region
          _
        $region56: #{tpu_custom_call.1} parent=11 // pred_fallthru
          _
        // Predicated region
        $region57: #{tpu_custom_call.1} parent=11 // pred_check
          %p607 = pneg %p364
        $region58: #{tpu_custom_call.1} parent=11 // pred_check_branch
          %609 = sbr.rel (%p607) target = $region60
        $region59: #{tpu_custom_call.1} parent=11 // pred_region
          _
        $region60: #{tpu_custom_call.1} parent=11 // pred_fallthru
          _
        // Predicated region
        $region61: #{tpu_custom_call.1} parent=11 // pred_check
          %p610 = pneg %p385
        $region62: #{tpu_custom_call.1} parent=11 // pred_check_branch
          %612 = sbr.rel (%p610) target = $region64
        $region63: #{tpu_custom_call.1} parent=11 // pred_region
          %614 = vsyncadd [#allocation8], 0
          %s615 = sshll.u32 %s15, 4
          %s616 = int_to_ptr.hbm [resolvable:$true] %s615
          %s617 = sshll.u32 [#allocation7], 4
          %s618 = int_to_ptr.vmem [resolvable:$true] %s617
          %623 = dma.hbm_to_vmem [thread:$0]  %s616, 256, %s618, [#allocation8], 128, 128, 8
        $region64: #{tpu_custom_call.1} parent=11 // pred_fallthru
          _
        // Predicated region
        $region65: #{tpu_custom_call.1} parent=11 // pred_check
          %p624 = pneg %p406
        $region66: #{tpu_custom_call.1} parent=11 // pred_check_branch
          %626 = sbr.rel (%p624) target = $region68
        $region67: #{tpu_custom_call.1} parent=11 // pred_region
          %628 = vsyncadd [#allocation8], 0
          %s629 = sshll.u32 %s16, 4
          %s630 = int_to_ptr.hbm [resolvable:$true] %s629
          %s631 = sshll.u32 [#allocation9], 4
          %s632 = int_to_ptr.vmem [resolvable:$true] %s631
          %637 = dma.hbm_to_vmem [thread:$0]  %s630, 256, %s632, [#allocation8], 128, 128, 8
        $region68: #{tpu_custom_call.1} parent=11 // pred_fallthru
          _
        // Predicated region
        $region69: #{tpu_custom_call.1} parent=11 // pred_check
          %p638 = pneg %p427
        $region70: #{tpu_custom_call.1} parent=11 // pred_check_branch
          %640 = sbr.rel (%p638) target = $region72
        $region71: #{tpu_custom_call.1} parent=11 // pred_region
          _
        $region72: #{tpu_custom_call.1} parent=11 // pred_fallthru
          _
        // Predicated region
        $region73: #{tpu_custom_call.1} parent=11 // pred_check
          %p641 = pneg %p448
        $region74: #{tpu_custom_call.1} parent=11 // pred_check_branch
          %643 = sbr.rel (%p641) target = $region76
        $region75: #{tpu_custom_call.1} parent=11 // pred_region
          %645 = vsyncadd [#allocation11], 0
          %s646 = sshll.u32 %s18, 4
          %s647 = int_to_ptr.hbm [resolvable:$true] %s646
          %s648 = sshll.u32 [#allocation10], 4
          %s649 = int_to_ptr.vmem [resolvable:$true] %s648
          %654 = dma.hbm_to_vmem [thread:$0]  %s647, 512, %s649, [#allocation11], 128, 128, 8
        $region76: #{tpu_custom_call.1} parent=11 // pred_fallthru
          _
        // Predicated region
        $region77: #{tpu_custom_call.1} parent=11 // pred_check
          %p655 = pneg %p469
        $region78: #{tpu_custom_call.1} parent=11 // pred_check_branch
          %657 = sbr.rel (%p655) target = $region80
        $region79: #{tpu_custom_call.1} parent=11 // pred_region
          _
        $region80: #{tpu_custom_call.1} parent=11 // pred_fallthru
          _
        // Predicated region
        $region81: #{tpu_custom_call.1} parent=11 // pred_check
          %p658 = pneg %p490
        $region82: #{tpu_custom_call.1} parent=11 // pred_check_branch
          %660 = sbr.rel (%p658) target = $region84
        $region83: #{tpu_custom_call.1} parent=11 // pred_region
          _
        $region84: #{tpu_custom_call.1} parent=11 // pred_fallthru
          _
        // Predicated region
        $region85: #{tpu_custom_call.1} parent=11 // pred_check
          %p661 = pneg %p511
        $region86: #{tpu_custom_call.1} parent=11 // pred_check_branch
          %663 = sbr.rel (%p661) target = $region88
        $region87: #{tpu_custom_call.1} parent=11 // pred_region
          _
        $region88: #{tpu_custom_call.1} parent=11 // pred_fallthru
          _
      $region12: #{tpu_custom_call.1} parent=5 // pred_fallthru
        _
      %p664 = scmp.lt.s32.totalorder %s34, 4
      // Predicated region
      $region89: #{tpu_custom_call.1} parent=5 // pred_check
        %p665 = pneg %p664
      $region90: #{tpu_custom_call.1} parent=5 // pred_check_branch
        %667 = sbr.rel (%p665) target = $region92
      $region91: #{tpu_custom_call.1} parent=5 // pred_region
        // Predicated region
        $region93: #{tpu_custom_call.1} parent=91 // pred_check
          %p668 = pneg %p54
        $region94: #{tpu_custom_call.1} parent=91 // pred_check_branch
          %670 = sbr.rel (%p668) target = $region96
        $region95: #{tpu_custom_call.1} parent=91 // pred_region
          %p671 = scmp.lt.s32.totalorder %s34, 3
          %s672 = scalar_select %p671, %s34, 3
          %s673 = smul.addr %s672, 8
          %s674 = scalar_lea.vmem %s0, %s673
        $region96: #{tpu_custom_call.1} parent=91 // pred_fallthru
          _
        // Predicated region
        $region97: #{tpu_custom_call.1} parent=91 // pred_check
          %p675 = pneg %p80
        $region98: #{tpu_custom_call.1} parent=91 // pred_check_branch
          %677 = sbr.rel (%p675) target = $region100
        $region99: #{tpu_custom_call.1} parent=91 // pred_region
          %p678 = scmp.lt.s32.totalorder %s34, 3
          %s679 = scalar_select %p678, %s34, 3
          %s680 = smul.addr %s679, 8
          %s681 = scalar_lea.vmem %s1, %s680
        $region100: #{tpu_custom_call.1} parent=91 // pred_fallthru
          _
        // Predicated region
        $region101: #{tpu_custom_call.1} parent=91 // pred_check
          %p682 = pneg %p106
        $region102: #{tpu_custom_call.1} parent=91 // pred_check_branch
          %684 = sbr.rel (%p682) target = $region104
        $region103: #{tpu_custom_call.1} parent=91 // pred_region
          %s685 = sand.u32 %s96, 1
          %s686 = scalar_lea.sflag [#allocation3], %s685
          %s687 = sand.u32 %s96, 1
          %s688 = smul.addr %s687, 8
          %s689 = scalar_lea.vmem [#allocation2], %s688
          %691 = vsyncadd %s686, 0
          %s692 = smul.addr %s34, 8
          %s693 = scalar_lea.hbm %s2, %s692
          %s695 = sshll.u32 %s693, 4
          %s696 = int_to_ptr.hbm [resolvable:$true] %s695
          %s697 = sshll.u32 %s689, 4
          %s698 = int_to_ptr.vmem [resolvable:$true] %s697
          %700 = dma.hbm_to_vmem [thread:$0]  %s696, 128, %s698, %s686
        $region104: #{tpu_custom_call.1} parent=91 // pred_fallthru
          _
      $region92: #{tpu_custom_call.1} parent=5 // pred_fallthru
        _
      %p701 = scmp.le.s32.totalorder 1, %s34
      %p702 = scmp.lt.s32.totalorder %s34, 5
      %p703 = pnand %p701, %p702
      %p704 = pneg %p703
      // Predicated region
      $region105: #{tpu_custom_call.1} parent=5 // pred_check
        _
      $region106: #{tpu_custom_call.1} parent=5 // pred_check_branch
        %706 = sbr.rel (%p703) target = $region108
      $region107: #{tpu_custom_call.1} parent=5 // pred_region
        %s707 = ssub.s32 %s34, 1
        %s708 = sand.u32 %s99, 1
        %s709 = scalar_lea.sflag [#allocation3], %s708
        %s710 = sand.u32 %s99, 1
        %s711 = smul.addr %s710, 8
        %s712 = scalar_lea.vmem [#allocation2], %s711
        // Predicated region
        $region109: #{tpu_custom_call.1} parent=107 // pred_check
          %p713 = pneg %p112
        $region110: #{tpu_custom_call.1} parent=107 // pred_check_branch
          %715 = sbr.rel (%p713) target = $region112
        $region111: #{tpu_custom_call.1} parent=107 // pred_region
          %717 = dma.done %s709, 128
        $region112: #{tpu_custom_call.1} parent=107 // pred_fallthru
          _
        // Predicated region
        $region113: #{tpu_custom_call.1} parent=107 // pred_check
          %p718 = pneg %p175
        $region114: #{tpu_custom_call.1} parent=107 // pred_check_branch
          %720 = sbr.rel (%p718) target = $region116
        $region115: #{tpu_custom_call.1} parent=107 // pred_region
          %722 = dma.done [#allocation5], 512
        $region116: #{tpu_custom_call.1} parent=107 // pred_fallthru
          _
        // Predicated region
        $region117: #{tpu_custom_call.1} parent=107 // pred_check
          %p723 = pneg %p259
        $region118: #{tpu_custom_call.1} parent=107 // pred_check_branch
          %725 = sbr.rel (%p723) target = $region120
        $region119: #{tpu_custom_call.1} parent=107 // pred_region
          %727 = dma.done [#allocation5], 256
        $region120: #{tpu_custom_call.1} parent=107 // pred_fallthru
          _
        // Predicated region
        $region121: #{tpu_custom_call.1} parent=107 // pred_check
          %p728 = pneg %p385
        $region122: #{tpu_custom_call.1} parent=107 // pred_check_branch
          %730 = sbr.rel (%p728) target = $region124
        $region123: #{tpu_custom_call.1} parent=107 // pred_region
          %732 = dma.done [#allocation8], 256
        $region124: #{tpu_custom_call.1} parent=107 // pred_fallthru
          _
        // Predicated region
        $region125: #{tpu_custom_call.1} parent=107 // pred_check
          %p733 = pneg %p406
        $region126: #{tpu_custom_call.1} parent=107 // pred_check_branch
          %735 = sbr.rel (%p733) target = $region128
        $region127: #{tpu_custom_call.1} parent=107 // pred_region
          %737 = dma.done [#allocation8], 256
        $region128: #{tpu_custom_call.1} parent=107 // pred_fallthru
          _
        // Predicated region
        $region129: #{tpu_custom_call.1} parent=107 // pred_check
          %p738 = pneg %p448
        $region130: #{tpu_custom_call.1} parent=107 // pred_check_branch
          %740 = sbr.rel (%p738) target = $region132
        $region131: #{tpu_custom_call.1} parent=107 // pred_region
          %742 = dma.done [#allocation11], 512
        $region132: #{tpu_custom_call.1} parent=107 // pred_fallthru
          _
        %p743 = scmp.lt.s32.totalorder %s39, 3
        %s744 = scalar_select %p743, %s39, 3
        %s745 = smul.addr %s744, 8
        %s746 = scalar_lea.vmem %s0, %s745
        %p747 = pneg %p60
        %p748 = pneg %p57
        %p749 = scmp.lt.s32.totalorder %s39, 3
        %s750 = scalar_select %p749, %s39, 3
        %s751 = smul.addr %s750, 8
        %s752 = scalar_lea.vmem %s1, %s751
        %p753 = pneg %p86
        %p754 = pneg %p83
        %s755 = sand.u32 %s99, 1
        %s756 = scalar_lea.sflag [#allocation3], %s755
        %s757 = sand.u32 %s99, 1
        %s758 = smul.addr %s757, 8
        %s759 = scalar_lea.vmem [#allocation2], %s758
        %p760 = pneg %p112
        %p761 = pneg %p109
        %p762 = pneg %p133
        %p763 = pneg %p130
        %p764 = pneg %p154
        %p765 = pneg %p151
        %p766 = pneg %p175
        %p767 = pneg %p172
        %p768 = pneg %p196
        %p769 = pneg %p193
        %p770 = pneg %p217
        %p771 = pneg %p214
        %p772 = pneg %p238
        %p773 = pneg %p235
        %p774 = pneg %p259
        %p775 = pneg %p256
        %p776 = pneg %p280
        %p777 = pneg %p277
        %p778 = pneg %p301
        %p779 = pneg %p298
        %p780 = pneg %p322
        %p781 = pneg %p319
        %p782 = pneg %p343
        %p783 = pneg %p340
        %p784 = pneg %p364
        %p785 = pneg %p361
        %p786 = pneg %p385
        %p787 = pneg %p382
        %p788 = pneg %p406
        %p789 = pneg %p403
        %p790 = pneg %p427
        %p791 = pneg %p424
        %p792 = pneg %p448
        %p793 = pneg %p445
        %p794 = pneg %p469
        %p795 = pneg %p466
        %p796 = pneg %p490
        %p797 = pneg %p487
        %p798 = pneg %p511
        %p799 = pneg %p508
        %p800 = pneg %p537
        %p801 = pneg %p534
        %p802 = scmp.lt.s32.totalorder %s39, 3
        %s803 = scalar_select %p802, %s39, 3
        %s804 = smul.addr %s803, 8
        %s805 = scalar_lea.vmem %s22, %s804
        %p806 = scmp.lt.s32.totalorder %s39, 3
        %s807 = scalar_select %p806, %s39, 3
        %s808 = smul.addr %s807, 8
        %s809 = scalar_lea.vmem %s0, %s808
        %p810 = scmp.lt.s32.totalorder %s39, 3
        %s811 = scalar_select %p810, %s39, 3
        %s812 = smul.addr %s811, 8
        %s813 = scalar_lea.vmem %s1, %s812
        %p814 = scmp.lt.s32.totalorder %s39, 3
        %s815 = scalar_select %p814, %s39, 3
        %s816 = smul.addr %s815, 8
        %s817 = scalar_lea.vmem %s22, %s816
        %v818 = vld [vmem:[%s809] sm:$0xff]
        %v819 = vld [vmem:[%s813] sm:$0xff]
        %v820 = vld [vmem:[%s3] sm:$0xff]
        %v821 = vld [vmem:[%s3 + $0x8] sm:$0xff]
        %v822 = vld [vmem:[%s4] sm:$0x1]
        %v824 = vperm.slane %v822, 0
        %vm826 = vcmask 130048
        %v828 = vsel %vm826, %v818, 0
        %830 = vmatpush.msra.mxu0 0.0
        %831 = vmatpush.msra.mxu0 0.0
        %832 = vmatpush.msra.mxu0 0.0
        %833 = vmatpush.msra.mxu0 0.0
        %834 = vmatpush.msra.mxu0 0.0
        %835 = vmatpush.msra.mxu0 0.0
        %836 = vmatpush.msra.mxu0 0.0
        %837 = vmatpush.msra.mxu0 0.0
        %838 = vmatpush.msra.mxu0 0.0
        %839 = vmatpush.msra.mxu0 0.0
        %840 = vmatpush.msra.mxu0 0.0
        %841 = vmatpush.msra.mxu0 0.0
        %842 = vmatpush.msra.mxu0 0.0
        %843 = vmatpush.msra.mxu0 0.0
        %844 = vmatpush.msra.mxu0 %v821
        %845 = vmatpush.msra.mxu0 %v820
        %846 = vmatmul.f32.gmra.mxu0 %v828
        %v847 = vpop.f32.mrf.mxu0
        %v848 = vadd.f32 %v824, %v847
        %849 = vdwg.mxu0
        %v850 = vmax.f32 %v848, 0.0
        %v851 = vld [vmem:[#allocation4] sm:$0xff]
        %v852 = vld [vmem:[#allocation4 + $0x8] sm:$0xff]
        %v853 = vld [vmem:[#allocation4 + $0x10] sm:$0xff]
        %v854 = vld [vmem:[#allocation4 + $0x18] sm:$0xff]
        %v855 = vld [vmem:[%s6] sm:$0x1]
        %v857 = vperm.slane %v855, 0
        %vm859 = vcmask 261120
        %v861 = vsel %vm859, %v850, 0
        %863 = vmatpush.msra.mxu0 0.0
        %864 = vmatpush.msra.mxu0 0.0
        %865 = vmatpush.msra.mxu0 0.0
        %866 = vmatpush.msra.mxu0 0.0
        %867 = vmatpush.msra.mxu0 0.0
        %868 = vmatpush.msra.mxu0 0.0
        %869 = vmatpush.msra.mxu0 0.0
        %870 = vmatpush.msra.mxu0 0.0
        %871 = vmatpush.msra.mxu0 0.0
        %872 = vmatpush.msra.mxu0 0.0
        %873 = vmatpush.msra.mxu0 0.0
        %874 = vmatpush.msra.mxu0 0.0
        %875 = vmatpush.msra.mxu0 %v854
        %876 = vmatpush.msra.mxu0 %v853
        %877 = vmatpush.msra.mxu0 %v852
        %878 = vmatpush.msra.mxu0 %v851
        %879 = vmatmul.f32.gmra.mxu0 %v861
        %v880 = vpop.f32.mrf.mxu0
        %v881 = vadd.f32 %v857, %v880
        %882 = vdwg.mxu0
        %v883 = vmax.f32 %v881, 0.0
        %v884 = vld [vmem:[%s7] sm:$0xff]
        %v885 = vld [vmem:[%s7 + $0x8] sm:$0xff]
        %v886 = vld [vmem:[%s7 + $0x10] sm:$0xff]
        %v887 = vld [vmem:[%s7 + $0x18] sm:$0xff]
        %v888 = vld [vmem:[%s8] sm:$0x1]
        %v890 = vperm.slane %v888, 0
        %v893 = vsel %vm859, %v883, 0
        %895 = vmatpush.msra.mxu0 0.0
        %896 = vmatpush.msra.mxu0 0.0
        %897 = vmatpush.msra.mxu0 0.0
        %898 = vmatpush.msra.mxu0 0.0
        %899 = vmatpush.msra.mxu0 0.0
        %900 = vmatpush.msra.mxu0 0.0
        %901 = vmatpush.msra.mxu0 0.0
        %902 = vmatpush.msra.mxu0 0.0
        %903 = vmatpush.msra.mxu0 0.0
        %904 = vmatpush.msra.mxu0 0.0
        %905 = vmatpush.msra.mxu0 0.0
        %906 = vmatpush.msra.mxu0 0.0
        %907 = vmatpush.msra.mxu0 %v887
        %908 = vmatpush.msra.mxu0 %v886
        %909 = vmatpush.msra.mxu0 %v885
        %910 = vmatpush.msra.mxu0 %v884
        %911 = vmatmul.f32.gmra.mxu0 %v893
        %v912 = vpop.f32.mrf.mxu0
        %v913 = vadd.f32 %v890, %v912
        %914 = vdwg.mxu0
        %v915 = vld [vmem:[#allocation6] sm:$0xff]
        %v916 = vld [vmem:[#allocation6 + $0x8] sm:$0xff]
        %v917 = vld [vmem:[%s10] sm:$0x1]
        %v919 = vperm.slane %v917, 0
        %v922 = vsel %vm826, %v913, 0
        %924 = vmatpush.msra.mxu0 0.0
        %925 = vmatpush.msra.mxu0 0.0
        %926 = vmatpush.msra.mxu0 0.0
        %927 = vmatpush.msra.mxu0 0.0
        %928 = vmatpush.msra.mxu0 0.0
        %929 = vmatpush.msra.mxu0 0.0
        %930 = vmatpush.msra.mxu0 0.0
        %931 = vmatpush.msra.mxu0 0.0
        %932 = vmatpush.msra.mxu0 0.0
        %933 = vmatpush.msra.mxu0 0.0
        %934 = vmatpush.msra.mxu0 0.0
        %935 = vmatpush.msra.mxu0 0.0
        %936 = vmatpush.msra.mxu0 0.0
        %937 = vmatpush.msra.mxu0 0.0
        %938 = vmatpush.msra.mxu0 %v916
        %939 = vmatpush.msra.mxu0 %v915
        %940 = vmatmul.f32.gmra.mxu0 %v922
        %v941 = vpop.f32.mrf.mxu0
        %v942 = vadd.f32 %v919, %v941
        %943 = vdwg.mxu0
        %v944 = vmax.f32 %v942, 0.0
        %v945 = vld [vmem:[%s11] sm:$0xff]
        %v946 = vld [vmem:[%s11 + $0x8] sm:$0xff]
        %v947 = vld [vmem:[%s11 + $0x10] sm:$0xff]
        %v948 = vld [vmem:[%s11 + $0x18] sm:$0xff]
        %v949 = vld [vmem:[%s11 + $0x20] sm:$0xff]
        %v950 = vld [vmem:[%s11 + $0x28] sm:$0xff]
        %v951 = vld [vmem:[%s11 + $0x30] sm:$0xff]
        %v952 = vld [vmem:[%s11 + $0x38] sm:$0xff]
        %v953 = vld [vmem:[%s11 + $0x40] sm:$0xff]
        %v954 = vld [vmem:[%s11 + $0x48] sm:$0xff]
        %v955 = vld [vmem:[%s11 + $0x50] sm:$0xff]
        %v956 = vld [vmem:[%s11 + $0x58] sm:$0xff]
        %v957 = vld [vmem:[%s12] sm:$0x1]
        %v959 = vperm.slane %v957, 0
        %vm961 = vcmask 785408
        %v963 = vsel %vm961, %v944, 0
        %965 = vmatpush.msra.mxu0 0.0
        %966 = vmatpush.msra.mxu0 0.0
        %967 = vmatpush.msra.mxu0 0.0
        %968 = vmatpush.msra.mxu0 0.0
        %969 = vmatpush.msra.mxu0 %v956
        %970 = vmatpush.msra.mxu0 %v955
        %971 = vmatpush.msra.mxu0 %v954
        %972 = vmatpush.msra.mxu0 %v953
        %973 = vmatpush.msra.mxu0 %v952
        %974 = vmatpush.msra.mxu0 %v951
        %975 = vmatpush.msra.mxu0 %v950
        %976 = vmatpush.msra.mxu0 %v949
        %977 = vmatpush.msra.mxu0 %v948
        %978 = vmatpush.msra.mxu0 %v947
        %979 = vmatpush.msra.mxu0 %v946
        %980 = vmatpush.msra.mxu0 %v945
        %981 = vmatmul.f32.gmra.mxu0 %v963
        %v982 = vpop.f32.mrf.mxu0
        %v983 = vadd.f32 %v959, %v982
        %984 = vdwg.mxu0
        %v985 = vmax.f32 %v983, 0.0
        %v986 = vld [vmem:[%s13] sm:$0xff]
        %v987 = vld [vmem:[%s13 + $0x8] sm:$0xff]
        %v988 = vld [vmem:[%s13 + $0x10] sm:$0xff]
        %v989 = vld [vmem:[%s13 + $0x18] sm:$0xff]
        %v990 = vld [vmem:[%s13 + $0x20] sm:$0xff]
        %v991 = vld [vmem:[%s13 + $0x28] sm:$0xff]
        %v992 = vld [vmem:[%s13 + $0x30] sm:$0xff]
        %v993 = vld [vmem:[%s13 + $0x38] sm:$0xff]
        %v994 = vld [vmem:[%s13 + $0x40] sm:$0xff]
        %v995 = vld [vmem:[%s13 + $0x48] sm:$0xff]
        %v996 = vld [vmem:[%s13 + $0x50] sm:$0xff]
        %v997 = vld [vmem:[%s13 + $0x58] sm:$0xff]
        %v998 = vld [vmem:[%s14] sm:$0x1]
        %v1000 = vperm.slane %v998, 0
        %v1003 = vsel %vm961, %v985, 0
        %1005 = vmatpush.msra.mxu0 0.0
        %1006 = vmatpush.msra.mxu0 0.0
        %1007 = vmatpush.msra.mxu0 0.0
        %1008 = vmatpush.msra.mxu0 0.0
        %1009 = vmatpush.msra.mxu0 %v997
        %1010 = vmatpush.msra.mxu0 %v996
        %1011 = vmatpush.msra.mxu0 %v995
        %1012 = vmatpush.msra.mxu0 %v994
        %1013 = vmatpush.msra.mxu0 %v993
        %1014 = vmatpush.msra.mxu0 %v992
        %1015 = vmatpush.msra.mxu0 %v991
        %1016 = vmatpush.msra.mxu0 %v990
        %1017 = vmatpush.msra.mxu0 %v989
        %1018 = vmatpush.msra.mxu0 %v988
        %1019 = vmatpush.msra.mxu0 %v987
        %1020 = vmatpush.msra.mxu0 %v986
        %1021 = vmatmul.f32.gmra.mxu0 %v1003
        %v1022 = vpop.f32.mrf.mxu0
        %v1023 = vadd.f32 %v1000, %v1022
        %1024 = vdwg.mxu0
        %1026 = vrot.lane.b32.xlu0 %v1023, 112
        %v1027 = vpop.permute.xlu0 %1026
        %v1028 = vsel %vm826, %v1023, 0
        %v1030 = vsel %vm826, %v1027, 0
        %1032 = vmatpush.xpose.msra.mxu0 0.0
        %1033 = vmatpush.xpose.msra.mxu0 0.0
        %1034 = vmatpush.xpose.msra.mxu0 0.0
        %1035 = vmatpush.xpose.msra.mxu0 0.0
        %1036 = vmatpush.xpose.msra.mxu0 0.0
        %1037 = vmatpush.xpose.msra.mxu0 0.0
        %1038 = vmatpush.xpose.msra.mxu0 0.0
        %1039 = vmatpush.xpose.msra.mxu0 0.0
        %1040 = vmatpush.xpose.msra.mxu0 0.0
        %1041 = vmatpush.xpose.msra.mxu0 0.0
        %1042 = vmatpush.xpose.msra.mxu0 0.0
        %1043 = vmatpush.xpose.msra.mxu0 0.0
        %1044 = vmatpush.xpose.msra.mxu0 0.0
        %1045 = vmatpush.xpose.msra.mxu0 0.0
        %1046 = vmatpush.xpose.msra.mxu0 0.0
        %1047 = vmatpush.xpose.msra.mxu0 %v1030
        %1048 = vmatmul.f32.gmra.mxu0 %v1028
        %v1049 = vpop.f32.mrf.mxu0
        %v1050 = vadd.f32 0.0, %v1049
        %1051 = vdwg.mxu0
        %vm1052 = vcmask 64512
        %v1053 = vsel %vm1052, %v1050, -inf
        %1054 = vmax.xlane.f32.xlu0 %v1053
        %v1055 = vpop.xlane.xlu0 %1054
        %v1056 = vsub.f32 %v1050, %v1055
        %v1057 = vmul.f32 %v1056, 1.442695
        %v1058 = vpow.pop %v1057
        %v1059 = vmul.f32 %v1058, %v819
        %v1060 = vsel %vm1052, %v1059, 0.0
        %1061 = vadd.xlane.f32.xlu0 %v1060
        %v1062 = vpop.xlane.xlu0 %1061
        %v1063 = vmax.f32 %v1062, 1e-12
        %v1064 = vrcp.pop %v1063
        %v1065 = vmul.f32 %v1059, %v1064
        %1066 = vrot.lane.b32.xlu0 %v1023, 96
        %v1067 = vpop.permute.xlu0 %1066
        %v1070 = vsel %vm1052, %v1065, 0
        %1072 = vmatpush.msra.mxu0 0.0
        %1073 = vmatpush.msra.mxu0 0.0
        %1074 = vmatpush.msra.mxu0 0.0
        %1075 = vmatpush.msra.mxu0 0.0
        %1076 = vmatpush.msra.mxu0 0.0
        %1077 = vmatpush.msra.mxu0 0.0
        %1078 = vmatpush.msra.mxu0 0.0
        %1079 = vmatpush.msra.mxu0 0.0
        %1080 = vmatpush.msra.mxu0 0.0
        %1081 = vmatpush.msra.mxu0 0.0
        %1082 = vmatpush.msra.mxu0 0.0
        %1083 = vmatpush.msra.mxu0 0.0
        %1084 = vmatpush.msra.mxu0 0.0
        %1085 = vmatpush.msra.mxu0 0.0
        %1086 = vmatpush.msra.mxu0 0.0
        %1087 = vmatpush.msra.mxu0 %v1067
        %1088 = vmatmul.f32.gmra.mxu0 %v1070
        %v1089 = vpop.f32.mrf.mxu0
        %v1090 = vadd.f32 %v913, %v1089
        %1091 = vdwg.mxu0
        %v1093 = vsel %vm826, %v1090, 0
        %1095 = vmatpush.msra.mxu0 0.0
        %1096 = vmatpush.msra.mxu0 0.0
        %1097 = vmatpush.msra.mxu0 0.0
        %1098 = vmatpush.msra.mxu0 0.0
        %1099 = vmatpush.msra.mxu0 0.0
        %1100 = vmatpush.msra.mxu0 0.0
        %1101 = vmatpush.msra.mxu0 0.0
        %1102 = vmatpush.msra.mxu0 0.0
        %1103 = vmatpush.msra.mxu0 0.0
        %1104 = vmatpush.msra.mxu0 0.0
        %1105 = vmatpush.msra.mxu0 0.0
        %1106 = vmatpush.msra.mxu0 0.0
        %1107 = vmatpush.msra.mxu0 0.0
        %1108 = vmatpush.msra.mxu0 0.0
        %1109 = vmatpush.msra.mxu0 %v916
        %1110 = vmatpush.msra.mxu0 %v915
        %1111 = vmatmul.f32.gmra.mxu0 %v1093
        %v1112 = vpop.f32.mrf.mxu0
        %v1113 = vadd.f32 %v919, %v1112
        %1114 = vdwg.mxu0
        %v1115 = vmax.f32 %v1113, 0.0
        %v1117 = vsel %vm961, %v1115, 0
        %1119 = vmatpush.msra.mxu0 0.0
        %1120 = vmatpush.msra.mxu0 0.0
        %1121 = vmatpush.msra.mxu0 0.0
        %1122 = vmatpush.msra.mxu0 0.0
        %1123 = vmatpush.msra.mxu0 %v956
        %1124 = vmatpush.msra.mxu0 %v955
        %1125 = vmatpush.msra.mxu0 %v954
        %1126 = vmatpush.msra.mxu0 %v953
        %1127 = vmatpush.msra.mxu0 %v952
        %1128 = vmatpush.msra.mxu0 %v951
        %1129 = vmatpush.msra.mxu0 %v950
        %1130 = vmatpush.msra.mxu0 %v949
        %1131 = vmatpush.msra.mxu0 %v948
        %1132 = vmatpush.msra.mxu0 %v947
        %1133 = vmatpush.msra.mxu0 %v946
        %1134 = vmatpush.msra.mxu0 %v945
        %1135 = vmatmul.f32.gmra.mxu0 %v1117
        %v1136 = vpop.f32.mrf.mxu0
        %v1137 = vadd.f32 %v959, %v1136
        %1138 = vdwg.mxu0
        %v1139 = vmax.f32 %v1137, 0.0
        %v1141 = vsel %vm961, %v1139, 0
        %1143 = vmatpush.msra.mxu0 0.0
        %1144 = vmatpush.msra.mxu0 0.0
        %1145 = vmatpush.msra.mxu0 0.0
        %1146 = vmatpush.msra.mxu0 0.0
        %1147 = vmatpush.msra.mxu0 %v997
        %1148 = vmatpush.msra.mxu0 %v996
        %1149 = vmatpush.msra.mxu0 %v995
        %1150 = vmatpush.msra.mxu0 %v994
        %1151 = vmatpush.msra.mxu0 %v993
        %1152 = vmatpush.msra.mxu0 %v992
        %1153 = vmatpush.msra.mxu0 %v991
        %1154 = vmatpush.msra.mxu0 %v990
        %1155 = vmatpush.msra.mxu0 %v989
        %1156 = vmatpush.msra.mxu0 %v988
        %1157 = vmatpush.msra.mxu0 %v987
        %1158 = vmatpush.msra.mxu0 %v986
        %1159 = vmatmul.f32.gmra.mxu0 %v1141
        %v1160 = vpop.f32.mrf.mxu0
        %v1161 = vadd.f32 %v1000, %v1160
        %1162 = vdwg.mxu0
        %1164 = vrot.lane.b32.xlu0 %v1161, 112
        %v1165 = vpop.permute.xlu0 %1164
        %v1166 = vsel %vm826, %v1161, 0
        %v1168 = vsel %vm826, %v1165, 0
        %1170 = vmatpush.xpose.msra.mxu0 0.0
        %1171 = vmatpush.xpose.msra.mxu0 0.0
        %1172 = vmatpush.xpose.msra.mxu0 0.0
        %1173 = vmatpush.xpose.msra.mxu0 0.0
        %1174 = vmatpush.xpose.msra.mxu0 0.0
        %1175 = vmatpush.xpose.msra.mxu0 0.0
        %1176 = vmatpush.xpose.msra.mxu0 0.0
        %1177 = vmatpush.xpose.msra.mxu0 0.0
        %1178 = vmatpush.xpose.msra.mxu0 0.0
        %1179 = vmatpush.xpose.msra.mxu0 0.0
        %1180 = vmatpush.xpose.msra.mxu0 0.0
        %1181 = vmatpush.xpose.msra.mxu0 0.0
        %1182 = vmatpush.xpose.msra.mxu0 0.0
        %1183 = vmatpush.xpose.msra.mxu0 0.0
        %1184 = vmatpush.xpose.msra.mxu0 0.0
        %1185 = vmatpush.xpose.msra.mxu0 %v1168
        %1186 = vmatmul.f32.gmra.mxu0 %v1166
        %v1187 = vpop.f32.mrf.mxu0
        %v1188 = vadd.f32 0.0, %v1187
        %1189 = vdwg.mxu0
        %v1190 = vsel %vm1052, %v1188, -inf
        %1191 = vmax.xlane.f32.xlu0 %v1190
        %v1192 = vpop.xlane.xlu0 %1191
        %v1193 = vsub.f32 %v1188, %v1192
        %v1194 = vmul.f32 %v1193, 1.442695
        %v1195 = vpow.pop %v1194
        %v1196 = vmul.f32 %v1195, %v819
        %v1197 = vsel %vm1052, %v1196, 0.0
        %1198 = vadd.xlane.f32.xlu0 %v1197
        %v1199 = vpop.xlane.xlu0 %1198
        %v1200 = vmax.f32 %v1199, 1e-12
        %v1201 = vrcp.pop %v1200
        %v1202 = vmul.f32 %v1196, %v1201
        %1203 = vrot.lane.b32.xlu0 %v1161, 96
        %v1204 = vpop.permute.xlu0 %1203
        %v1207 = vsel %vm1052, %v1202, 0
        %1209 = vmatpush.msra.mxu0 0.0
        %1210 = vmatpush.msra.mxu0 0.0
        %1211 = vmatpush.msra.mxu0 0.0
        %1212 = vmatpush.msra.mxu0 0.0
        %1213 = vmatpush.msra.mxu0 0.0
        %1214 = vmatpush.msra.mxu0 0.0
        %1215 = vmatpush.msra.mxu0 0.0
        %1216 = vmatpush.msra.mxu0 0.0
        %1217 = vmatpush.msra.mxu0 0.0
        %1218 = vmatpush.msra.mxu0 0.0
        %1219 = vmatpush.msra.mxu0 0.0
        %1220 = vmatpush.msra.mxu0 0.0
        %1221 = vmatpush.msra.mxu0 0.0
        %1222 = vmatpush.msra.mxu0 0.0
        %1223 = vmatpush.msra.mxu0 0.0
        %1224 = vmatpush.msra.mxu0 %v1204
        %1225 = vmatmul.f32.gmra.mxu0 %v1207
        %v1226 = vpop.f32.mrf.mxu0
        %v1227 = vadd.f32 %v1090, %v1226
        %1228 = vdwg.mxu0
        %v1229 = vld [vmem:[#allocation7] sm:$0xff]
        %v1230 = vld [vmem:[#allocation7 + $0x8] sm:$0xff]
        %v1231 = vld [vmem:[%s712] sm:$0xff]
        %v1232 = vld [vmem:[#allocation9] sm:$0xff]
        %v1233 = vld [vmem:[#allocation9 + $0x8] sm:$0xff]
        %v1235 = vsel %vm826, %v1231, 0
        %1237 = vmatpush.msra.mxu0 0.0
        %1238 = vmatpush.msra.mxu0 0.0
        %1239 = vmatpush.msra.mxu0 0.0
        %1240 = vmatpush.msra.mxu0 0.0
        %1241 = vmatpush.msra.mxu0 0.0
        %1242 = vmatpush.msra.mxu0 0.0
        %1243 = vmatpush.msra.mxu0 0.0
        %1244 = vmatpush.msra.mxu0 0.0
        %1245 = vmatpush.msra.mxu0 0.0
        %1246 = vmatpush.msra.mxu0 0.0
        %1247 = vmatpush.msra.mxu0 0.0
        %1248 = vmatpush.msra.mxu0 0.0
        %1249 = vmatpush.msra.mxu0 0.0
        %1250 = vmatpush.msra.mxu0 0.0
        %1251 = vmatpush.msra.mxu0 %v1233
        %1252 = vmatpush.msra.mxu0 %v1232
        %1253 = vmatmul.f32.gmra.mxu0 %v1235
        %v1254 = vpop.f32.mrf.mxu0
        %v1255 = vadd.f32 0.0, %v1254
        %1256 = vdwg.mxu0
        %v1258 = vsel %vm826, %v1227, 0
        %1260 = vmatpush.msra.mxu0 0.0
        %1261 = vmatpush.msra.mxu0 0.0
        %1262 = vmatpush.msra.mxu0 0.0
        %1263 = vmatpush.msra.mxu0 0.0
        %1264 = vmatpush.msra.mxu0 0.0
        %1265 = vmatpush.msra.mxu0 0.0
        %1266 = vmatpush.msra.mxu0 0.0
        %1267 = vmatpush.msra.mxu0 0.0
        %1268 = vmatpush.msra.mxu0 0.0
        %1269 = vmatpush.msra.mxu0 0.0
        %1270 = vmatpush.msra.mxu0 0.0
        %1271 = vmatpush.msra.mxu0 0.0
        %1272 = vmatpush.msra.mxu0 0.0
        %1273 = vmatpush.msra.mxu0 0.0
        %1274 = vmatpush.msra.mxu0 %v1230
        %1275 = vmatpush.msra.mxu0 %v1229
        %1276 = vmatmul.f32.gmra.mxu0 %v1258
        %v1277 = vpop.f32.mrf.mxu0
        %v1278 = vadd.f32 %v1255, %v1277
        %1279 = vdwg.mxu0
        %v1280 = vld [vmem:[%s17] sm:$0x1]
        %v1282 = vperm.slane %v1280, 0
        %v1284 = vadd.f32 %v1278, %v1282
        %v1285 = vmax.f32 %v1284, 0.0
        %v1286 = vld [vmem:[#allocation10] sm:$0xff]
        %v1287 = vld [vmem:[#allocation10 + $0x8] sm:$0xff]
        %v1288 = vld [vmem:[#allocation10 + $0x10] sm:$0xff]
        %v1289 = vld [vmem:[#allocation10 + $0x18] sm:$0xff]
        %v1290 = vld [vmem:[%s19] sm:$0x1]
        %v1292 = vperm.slane %v1290, 0
        %v1295 = vsel %vm859, %v1285, 0
        %1297 = vmatpush.msra.mxu0 0.0
        %1298 = vmatpush.msra.mxu0 0.0
        %1299 = vmatpush.msra.mxu0 0.0
        %1300 = vmatpush.msra.mxu0 0.0
        %1301 = vmatpush.msra.mxu0 0.0
        %1302 = vmatpush.msra.mxu0 0.0
        %1303 = vmatpush.msra.mxu0 0.0
        %1304 = vmatpush.msra.mxu0 0.0
        %1305 = vmatpush.msra.mxu0 0.0
        %1306 = vmatpush.msra.mxu0 0.0
        %1307 = vmatpush.msra.mxu0 0.0
        %1308 = vmatpush.msra.mxu0 0.0
        %1309 = vmatpush.msra.mxu0 %v1289
        %1310 = vmatpush.msra.mxu0 %v1288
        %1311 = vmatpush.msra.mxu0 %v1287
        %1312 = vmatpush.msra.mxu0 %v1286
        %1313 = vmatmul.f32.gmra.mxu0 %v1295
        %v1314 = vpop.f32.mrf.mxu0
        %v1315 = vadd.f32 %v1292, %v1314
        %1316 = vdwg.mxu0
        %v1317 = vmax.f32 %v1315, 0.0
        %v1318 = vld [vmem:[%s20] sm:$0xff]
        %v1319 = vld [vmem:[%s20 + $0x8] sm:$0xff]
        %v1320 = vld [vmem:[%s20 + $0x10] sm:$0xff]
        %v1321 = vld [vmem:[%s20 + $0x18] sm:$0xff]
        %v1322 = vld [vmem:[%s21] sm:$0x1]
        %v1324 = vperm.slane %v1322, 0
        %v1327 = vsel %vm859, %v1317, 0
        %1329 = vmatpush.msra.mxu0 0.0
        %1330 = vmatpush.msra.mxu0 0.0
        %1331 = vmatpush.msra.mxu0 0.0
        %1332 = vmatpush.msra.mxu0 0.0
        %1333 = vmatpush.msra.mxu0 0.0
        %1334 = vmatpush.msra.mxu0 0.0
        %1335 = vmatpush.msra.mxu0 0.0
        %1336 = vmatpush.msra.mxu0 0.0
        %1337 = vmatpush.msra.mxu0 0.0
        %1338 = vmatpush.msra.mxu0 0.0
        %1339 = vmatpush.msra.mxu0 0.0
        %1340 = vmatpush.msra.mxu0 0.0
        %1341 = vmatpush.msra.mxu0 %v1321
        %1342 = vmatpush.msra.mxu0 %v1320
        %1343 = vmatpush.msra.mxu0 %v1319
        %1344 = vmatpush.msra.mxu0 %v1318
        %1345 = vmatmul.f32.gmra.mxu0 %v1327
        %v1346 = vpop.f32.mrf.mxu0
        %v1347 = vadd.f32 %v1324, %v1346
        %1348 = vdwg.mxu0
        %vm1349 = vcmask 15360
        %1350 = vst.msk [vmem:[%s817] sm:$0xff] %vm1349, %v1347
        %p1351 = scmp.lt.s32.totalorder %s39, 3
        %s1352 = scalar_select %p1351, %s39, 3
        %s1353 = smul.addr %s1352, 8
        %s1354 = scalar_lea.vmem %s22, %s1353
        // Predicated region
        $region133: #{tpu_custom_call.1} parent=107 // pred_check
          %p1355 = pneg %p534
        $region134: #{tpu_custom_call.1} parent=107 // pred_check_branch
          %1357 = sbr.rel (%p1355) target = $region136
        $region135: #{tpu_custom_call.1} parent=107 // pred_region
          _
        $region136: #{tpu_custom_call.1} parent=107 // pred_fallthru
          _
      $region108: #{tpu_custom_call.1} parent=5 // pred_fallthru
        _
      %p1358 = scmp.le.s32.totalorder 2, %s34
      // Predicated region
      $region137: #{tpu_custom_call.1} parent=5 // pred_check
        %p1359 = pneg %p1358
      $region138: #{tpu_custom_call.1} parent=5 // pred_check_branch
        %1361 = sbr.rel (%p1359) target = $region140
      $region139: #{tpu_custom_call.1} parent=5 // pred_region
        %s1362 = ssub.s32 %s34, 2
        // Predicated region
        $region141: #{tpu_custom_call.1} parent=139 // pred_check
          %p1363 = pneg %p540
        $region142: #{tpu_custom_call.1} parent=139 // pred_check_branch
          %1365 = sbr.rel (%p1363) target = $region144
        $region143: #{tpu_custom_call.1} parent=139 // pred_region
          %p1366 = scmp.lt.s32.totalorder %s40, 3
          %s1367 = scalar_select %p1366, %s40, 3
          %s1368 = smul.addr %s1367, 8
          %s1369 = scalar_lea.vmem %s22, %s1368
        $region144: #{tpu_custom_call.1} parent=139 // pred_fallthru
          _
      $region140: #{tpu_custom_call.1} parent=5 // pred_fallthru
        _
    $region6: #{tpu_custom_call.1} parent=1 // loop_footer
      %s38 = sadd.s32 1, %s34
    $region7: #{tpu_custom_call.1} parent=1 // loop_footer_branch
      %33 = sbr.rel target = $region3
    $region8: #{tpu_custom_call.1} parent=1 // loop_exit
      _
    %1370 = vsyncpa [#allocation3], 1
    %s1371 = scalar_lea.sflag [#allocation3], 1
    %1372 = vsyncpa %s1371, 1
    %1373 = vsyncpa [#allocation5], 1
    %1374 = vsyncpa [#allocation8], 1
    %1375 = vsyncpa [#allocation11], 1

</llo_original>
